<compile_context>
chip_gen: v7x
topology: tpu7x:2x2x1
jax: 0.10.0
libtpu: 0.0.40
codegen_flags: <defaults>
</compile_context>

<pallas_src>
import numpy as np
import jax
import jax.numpy as jnp
from jax.experimental import pallas as pl
from jax.experimental.pallas import tpu as pltpu

C_IN, C_MID, C_OUT = 1536, 128, 32
H = W = 7
HW = H * W
EPS = 1e-5
INV_HW = 1.0 / HW

# Horizontal-validity masks for the 3x3 conv, in OUTPUT-row coordinates:
#   mask[0][r] = 1 if (r % W) >= 1      (tap column offset ow = -1)
#   mask[1][r] = 1 if (r % W) <= W - 2  (tap column offset ow = +1)
# Vertical padding is handled by the zero-filled row shift inside the kernel.
_W_OF_ROW = np.arange(HW) % W
_H_MASKS = np.stack([(_W_OF_ROW >= 1).astype(np.float32),
                     (_W_OF_ROW <= W - 2).astype(np.float32)]).reshape(2, HW, 1)


def _fused_kernel(x_ref, g1_ref, b1_ref, w1_ref, g2_ref, b2_ref, w2_ref,
                  mask_ref, out_ref):
    # ---- BatchNorm2d(1536), batch stats, single pass + ReLU ----
    x = x_ref[...]                                        # (HW, C_IN) f32
    s1 = jnp.sum(x, axis=0, keepdims=True)                # (1, C_IN)
    q1 = jnp.sum(x * x, axis=0, keepdims=True)
    m1 = s1 * INV_HW
    v1 = q1 * INV_HW - m1 * m1                            # biased variance
    scale1 = jax.lax.rsqrt(v1 + EPS) * g1_ref[...]
    shift1 = b1_ref[...] - m1 * scale1
    xh = jnp.maximum(x * scale1 + shift1, 0.0)

    # ---- Conv2d 1x1 (1536 -> 128): one MXU matmul ----
    y = jnp.dot(xh, w1_ref[...], preferred_element_type=jnp.float32)  # (HW, C_MID)

    # ---- BatchNorm2d(128), batch stats, single pass + ReLU ----
    s2 = jnp.sum(y, axis=0, keepdims=True)
    q2 = jnp.sum(y * y, axis=0, keepdims=True)
    m2 = s2 * INV_HW
    v2 = q2 * INV_HW - m2 * m2
    scale2 = jax.lax.rsqrt(v2 + EPS) * g2_ref[...]
    shift2 = b2_ref[...] - m2 * scale2
    yh = jnp.maximum(y * scale2 + shift2, 0.0)            # (HW, C_MID)

    # ---- Conv2d 3x3, stride 1, pad 1 (128 -> 32) ----
    # One combined matmul over all 9 taps: Z[:, t*32:(t+1)*32] = yh @ w_tap.
    # out[r] = sum_t valid_t(r) * Z[r + s_t, tap t], s_t = 7*oh + ow.
    # Zero-filled row shift covers vertical padding; horizontal padding is a
    # per-output-row 0/1 mask (only taps with ow = +-1 need it).
    Z = jnp.dot(yh, w2_ref[...], preferred_element_type=jnp.float32)  # (HW, 9*C_OUT)
    m_left = mask_ref[0]                                  # (HW, 1), ow = -1
    m_right = mask_ref[1]                                 # (HW, 1), ow = +1
    acc = jnp.zeros((HW, C_OUT), jnp.float32)
    for t in range(9):                                    # fully unrolled
        oh, ow = t // 3 - 1, t % 3 - 1
        s = oh * W + ow
        z = Z[:, t * C_OUT:(t + 1) * C_OUT]               # (HW, C_OUT)
        if s > 0:
            z = jnp.concatenate(
                [z[s:, :], jnp.zeros((s, C_OUT), jnp.float32)], axis=0)
        elif s < 0:
            z = jnp.concatenate(
                [jnp.zeros((-s, C_OUT), jnp.float32), z[:HW + s, :]], axis=0)
        if ow == -1:
            z = z * m_left
        elif ow == 1:
            z = z * m_right
        acc = acc + z
    out_ref[...] = acc                                    # single output store


@jax.jit
def fused_forward(x_nchw, g1, b1, w1, g2, b2, w2_hwio):
    """x_nchw: (1, 1536, 7, 7) f32. Returns (1, 32, 7, 7) f32."""
    x = jnp.transpose(x_nchw[0], (1, 2, 0)).reshape(HW, C_IN)   # [H*W, Cin]
    # Tap-concatenated 3x3 weight: (Cin, 9*Cout), tap t in columns t*32:(t+1)*32.
    w2_all = jnp.transpose(w2_hwio.reshape(9, C_MID, C_OUT),
                           (1, 0, 2)).reshape(C_MID, 9 * C_OUT)
    masks = jnp.asarray(_H_MASKS)

    vmem = pl.BlockSpec(memory_space=pltpu.MemorySpace.VMEM)
    out_flat = pl.pallas_call(
        _fused_kernel,
        out_shape=jax.ShapeDtypeStruct((HW, C_OUT), jnp.float32),
        in_specs=[vmem] * 8,
        out_specs=vmem,
        cost_estimate=pl.CostEstimate(
            flops=23_000_000, transcendentals=1_700, bytes_accessed=1_300_000),
    )(x,
      g1.reshape(1, C_IN), b1.reshape(1, C_IN), w1,
      g2.reshape(1, C_MID), b2.reshape(1, C_MID), w2_all, masks)

    return jnp.transpose(out_flat.reshape(H, W, C_OUT), (2, 0, 1))[None]


def reference_forward(x_nchw, g1, b1, w1, g2, b2, w2_hwio):
    """Pure-JAX reference with identical (training-mode BN) semantics."""
    x = jnp.transpose(x_nchw, (0, 2, 3, 1))                     # NHWC
    m1 = jnp.mean(x, axis=(0, 1, 2))
    v1 = jnp.var(x, axis=(0, 1, 2))                             # biased
    x = jnp.maximum((x - m1) * jax.lax.rsqrt(v1 + EPS) * g1 + b1, 0.0)
    y = jnp.einsum('nhwc,co->nhwo', x, w1)
    m2 = jnp.mean(y, axis=(0, 1, 2))
    v2 = jnp.var(y, axis=(0, 1, 2))
    y = jnp.maximum((y - m2) * jax.lax.rsqrt(v2 + EPS) * g2 + b2, 0.0)
    out = jax.lax.conv_general_dilated(
        y, w2_hwio, window_strides=(1, 1), padding=((1, 1), (1, 1)),
        dimension_numbers=('NHWC', 'HWIO', 'NHWC'))
    return jnp.transpose(out, (0, 3, 1, 2))                     # NCHW


if __name__ == "__main__":
    key = jax.random.PRNGKey(0)
    kx, kw1, kw2, kg1, kb1, kg2, kb2 = jax.random.split(key, 7)

    # Input matching the module: [1, 1536, 7, 7]
    x = jax.random.normal(kx, (1, C_IN, H, W), dtype=jnp.float32)

    # Deterministic synthetic parameters (shapes from the module __init__).
    g1 = 1.0 + 0.1 * jax.random.normal(kg1, (C_IN,), dtype=jnp.float32)
    b1 = 0.1 * jax.random.normal(kb1, (C_IN,), dtype=jnp.float32)
    w1 = 0.02 * jax.random.normal(kw1, (C_IN, C_MID), dtype=jnp.float32)
    g2 = 1.0 + 0.1 * jax.random.normal(kg2, (C_MID,), dtype=jnp.float32)
    b2 = 0.1 * jax.random.normal(kb2, (C_MID,), dtype=jnp.float32)
    w2 = 0.05 * jax.random.normal(kw2, (3, 3, C_MID, C_OUT), dtype=jnp.float32)

    out = jax.block_until_ready(fused_forward(x, g1, b1, w1, g2, b2, w2))
    ref = jax.block_until_ready(reference_forward(x, g1, b1, w1, g2, b2, w2))

    assert out.shape == (1, C_OUT, H, W), out.shape
    assert jnp.allclose(out, ref, rtol=1e-3, atol=1e-3), \
        float(jnp.max(jnp.abs(out - ref)))
    print("KERNEL_OK")
</pallas_src>

<mosaic_0001>
module attributes {stable_mosaic.version = 11 : i64} {
  func.func @_fused_kernel(%arg0: memref<49x1536xf32, #tpu.memory_space<vmem>>, %arg1: memref<1x1536xf32, #tpu.memory_space<vmem>>, %arg2: memref<1x1536xf32, #tpu.memory_space<vmem>>, %arg3: memref<1536x128xf32, #tpu.memory_space<vmem>>, %arg4: memref<1x128xf32, #tpu.memory_space<vmem>>, %arg5: memref<1x128xf32, #tpu.memory_space<vmem>>, %arg6: memref<128x288xf32, #tpu.memory_space<vmem>>, %arg7: memref<2x49x1xf32, #tpu.memory_space<vmem>>, %arg8: memref<49x32xf32, #tpu.memory_space<vmem>>) attributes {dimension_semantics = [], scalar_prefetch = 0 : i64, scratch_operands = 0 : i64, tpu.core_type = #tpu.core_type<tc>} {
    %c0 = arith.constant 0 : index
    %c0_0 = arith.constant 0 : index
    %0 = vector.load %arg0[%c0, %c0_0] : memref<49x1536xf32, #tpu.memory_space<vmem>>, vector<49x1536xf32>
    %cst = arith.constant dense<0.000000e+00> : vector<1536xf32>
    %1 = vector.multi_reduction <add>, %0, %cst [0] : vector<49x1536xf32> to vector<1536xf32>
    %2 = vector.shape_cast %1 : vector<1536xf32> to vector<1x1536xf32>
    %3 = arith.mulf %0, %0 : vector<49x1536xf32>
    %cst_1 = arith.constant dense<0.000000e+00> : vector<1536xf32>
    %4 = vector.multi_reduction <add>, %3, %cst_1 [0] : vector<49x1536xf32> to vector<1536xf32>
    %5 = vector.shape_cast %4 : vector<1536xf32> to vector<1x1536xf32>
    %cst_2 = arith.constant 0.0204081628 : f32
    %6 = vector.broadcast %cst_2 : f32 to vector<1x1536xf32>
    %7 = arith.mulf %2, %6 : vector<1x1536xf32>
    %cst_3 = arith.constant 0.0204081628 : f32
    %8 = vector.broadcast %cst_3 : f32 to vector<1x1536xf32>
    %9 = arith.mulf %5, %8 : vector<1x1536xf32>
    %10 = arith.mulf %7, %7 : vector<1x1536xf32>
    %11 = arith.subf %9, %10 : vector<1x1536xf32>
    %cst_4 = arith.constant 9.99999974E-6 : f32
    %12 = vector.broadcast %cst_4 : f32 to vector<1x1536xf32>
    %13 = arith.addf %11, %12 : vector<1x1536xf32>
    %14 = math.rsqrt %13 : vector<1x1536xf32>
    %c0_5 = arith.constant 0 : index
    %c0_6 = arith.constant 0 : index
    %15 = vector.load %arg1[%c0_5, %c0_6] : memref<1x1536xf32, #tpu.memory_space<vmem>>, vector<1x1536xf32>
    %16 = arith.mulf %14, %15 : vector<1x1536xf32>
    %c0_7 = arith.constant 0 : index
    %c0_8 = arith.constant 0 : index
    %17 = vector.load %arg2[%c0_7, %c0_8] : memref<1x1536xf32, #tpu.memory_space<vmem>>, vector<1x1536xf32>
    %18 = arith.mulf %7, %16 : vector<1x1536xf32>
    %19 = arith.subf %17, %18 : vector<1x1536xf32>
    %20 = vector.broadcast %16 : vector<1x1536xf32> to vector<49x1536xf32>
    %21 = arith.mulf %0, %20 : vector<49x1536xf32>
    %22 = vector.broadcast %19 : vector<1x1536xf32> to vector<49x1536xf32>
    %23 = arith.addf %21, %22 : vector<49x1536xf32>
    %cst_9 = arith.constant 0.000000e+00 : f32
    %24 = vector.broadcast %cst_9 : f32 to vector<49x1536xf32>
    %25 = arith.maximumf %23, %24 : vector<49x1536xf32>
    %c0_10 = arith.constant 0 : index
    %c0_11 = arith.constant 0 : index
    %26 = vector.load %arg3[%c0_10, %c0_11] : memref<1536x128xf32, #tpu.memory_space<vmem>>, vector<1536x128xf32>
    %cst_12 = arith.constant dense<0.000000e+00> : vector<49x128xf32>
    %27 = tpu.matmul %25, %26, %cst_12 {dimension_numbers = #tpu.dot_dimension_numbers<[1], [0], [0], [1], [0, 0, 1, 1], [], []>} : vector<49x1536xf32>, vector<1536x128xf32>, vector<49x128xf32> -> vector<49x128xf32>
    %cst_13 = arith.constant dense<0.000000e+00> : vector<128xf32>
    %28 = vector.multi_reduction <add>, %27, %cst_13 [0] : vector<49x128xf32> to vector<128xf32>
    %29 = vector.shape_cast %28 : vector<128xf32> to vector<1x128xf32>
    %30 = arith.mulf %27, %27 : vector<49x128xf32>
    %cst_14 = arith.constant dense<0.000000e+00> : vector<128xf32>
    %31 = vector.multi_reduction <add>, %30, %cst_14 [0] : vector<49x128xf32> to vector<128xf32>
    %32 = vector.shape_cast %31 : vector<128xf32> to vector<1x128xf32>
    %cst_15 = arith.constant 0.0204081628 : f32
    %33 = vector.broadcast %cst_15 : f32 to vector<1x128xf32>
    %34 = arith.mulf %29, %33 : vector<1x128xf32>
    %cst_16 = arith.constant 0.0204081628 : f32
    %35 = vector.broadcast %cst_16 : f32 to vector<1x128xf32>
    %36 = arith.mulf %32, %35 : vector<1x128xf32>
    %37 = arith.mulf %34, %34 : vector<1x128xf32>
    %38 = arith.subf %36, %37 : vector<1x128xf32>
    %cst_17 = arith.constant 9.99999974E-6 : f32
    %39 = vector.broadcast %cst_17 : f32 to vector<1x128xf32>
    %40 = arith.addf %38, %39 : vector<1x128xf32>
    %41 = math.rsqrt %40 : vector<1x128xf32>
    %c0_18 = arith.constant 0 : index
    %c0_19 = arith.constant 0 : index
    %42 = vector.load %arg4[%c0_18, %c0_19] : memref<1x128xf32, #tpu.memory_space<vmem>>, vector<1x128xf32>
    %43 = arith.mulf %41, %42 : vector<1x128xf32>
    %c0_20 = arith.constant 0 : index
    %c0_21 = arith.constant 0 : index
    %44 = vector.load %arg5[%c0_20, %c0_21] : memref<1x128xf32, #tpu.memory_space<vmem>>, vector<1x128xf32>
    %45 = arith.mulf %34, %43 : vector<1x128xf32>
    %46 = arith.subf %44, %45 : vector<1x128xf32>
    %47 = vector.broadcast %43 : vector<1x128xf32> to vector<49x128xf32>
    %48 = arith.mulf %27, %47 : vector<49x128xf32>
    %49 = vector.broadcast %46 : vector<1x128xf32> to vector<49x128xf32>
    %50 = arith.addf %48, %49 : vector<49x128xf32>
    %cst_22 = arith.constant 0.000000e+00 : f32
    %51 = vector.broadcast %cst_22 : f32 to vector<49x128xf32>
    %52 = arith.maximumf %50, %51 : vector<49x128xf32>
    %c0_23 = arith.constant 0 : index
    %c0_24 = arith.constant 0 : index
    %53 = vector.load %arg6[%c0_23, %c0_24] : memref<128x288xf32, #tpu.memory_space<vmem>>, vector<128x288xf32>
    %cst_25 = arith.constant dense<0.000000e+00> : vector<49x288xf32>
    %54 = tpu.matmul %52, %53, %cst_25 {dimension_numbers = #tpu.dot_dimension_numbers<[1], [0], [0], [1], [0, 0, 1, 1], [], []>} : vector<49x128xf32>, vector<128x288xf32>, vector<49x288xf32> -> vector<49x288xf32>
    %c0_26 = arith.constant 0 : index
    %c0_27 = arith.constant 0 : index
    %c0_28 = arith.constant 0 : index
    %55 = vector.load %arg7[%c0_26, %c0_27, %c0_28] : memref<2x49x1xf32, #tpu.memory_space<vmem>>, vector<1x49x1xf32>
    %56 = vector.shape_cast %55 : vector<1x49x1xf32> to vector<49x1xf32>
    %c1 = arith.constant 1 : index
    %c0_29 = arith.constant 0 : index
    %c0_30 = arith.constant 0 : index
    %57 = vector.load %arg7[%c1, %c0_29, %c0_30] : memref<2x49x1xf32, #tpu.memory_space<vmem>>, vector<1x49x1xf32>
    %58 = vector.shape_cast %57 : vector<1x49x1xf32> to vector<49x1xf32>
    %cst_31 = arith.constant 0.000000e+00 : f32
    %59 = vector.broadcast %cst_31 : f32 to vector<49x32xf32>
    %60 = vector.extract_strided_slice %54 {offsets = [0, 0], sizes = [49, 32], strides = [1, 1]} : vector<49x288xf32> to vector<49x32xf32>
    %cst_32 = arith.constant 0.000000e+00 : f32
    %61 = vector.broadcast %cst_32 : f32 to vector<8x32xf32>
    %62 = vector.extract_strided_slice %60 {offsets = [0, 0], sizes = [41, 32], strides = [1, 1]} : vector<49x32xf32> to vector<41x32xf32>
    %63 = tpu.concatenate %61, %62 in 0 : vector<8x32xf32>, vector<41x32xf32> -> vector<49x32xf32>
    %64 = vector.broadcast %56 : vector<49x1xf32> to vector<49x32xf32>
    %65 = arith.mulf %63, %64 : vector<49x32xf32>
    %66 = arith.addf %59, %65 : vector<49x32xf32>
    %67 = vector.extract_strided_slice %54 {offsets = [0, 32], sizes = [49, 32], strides = [1, 1]} : vector<49x288xf32> to vector<49x32xf32>
    %cst_33 = arith.constant 0.000000e+00 : f32
    %68 = vector.broadcast %cst_33 : f32 to vector<7x32xf32>
    %69 = vector.extract_strided_slice %67 {offsets = [0, 0], sizes = [42, 32], strides = [1, 1]} : vector<49x32xf32> to vector<42x32xf32>
    %70 = tpu.concatenate %68, %69 in 0 : vector<7x32xf32>, vector<42x32xf32> -> vector<49x32xf32>
    %71 = arith.addf %66, %70 : vector<49x32xf32>
    %72 = vector.extract_strided_slice %54 {offsets = [0, 64], sizes = [49, 32], strides = [1, 1]} : vector<49x288xf32> to vector<49x32xf32>
    %cst_34 = arith.constant 0.000000e+00 : f32
    %73 = vector.broadcast %cst_34 : f32 to vector<6x32xf32>
    %74 = vector.extract_strided_slice %72 {offsets = [0, 0], sizes = [43, 32], strides = [1, 1]} : vector<49x32xf32> to vector<43x32xf32>
    %75 = tpu.concatenate %73, %74 in 0 : vector<6x32xf32>, vector<43x32xf32> -> vector<49x32xf32>
    %76 = vector.broadcast %58 : vector<49x1xf32> to vector<49x32xf32>
    %77 = arith.mulf %75, %76 : vector<49x32xf32>
    %78 = arith.addf %71, %77 : vector<49x32xf32>
    %79 = vector.extract_strided_slice %54 {offsets = [0, 96], sizes = [49, 32], strides = [1, 1]} : vector<49x288xf32> to vector<49x32xf32>
    %cst_35 = arith.constant 0.000000e+00 : f32
    %80 = vector.broadcast %cst_35 : f32 to vector<1x32xf32>
    %81 = vector.extract_strided_slice %79 {offsets = [0, 0], sizes = [48, 32], strides = [1, 1]} : vector<49x32xf32> to vector<48x32xf32>
    %82 = tpu.concatenate %80, %81 in 0 : vector<1x32xf32>, vector<48x32xf32> -> vector<49x32xf32>
    %83 = vector.broadcast %56 : vector<49x1xf32> to vector<49x32xf32>
    %84 = arith.mulf %82, %83 : vector<49x32xf32>
    %85 = arith.addf %78, %84 : vector<49x32xf32>
    %86 = vector.extract_strided_slice %54 {offsets = [0, 128], sizes = [49, 32], strides = [1, 1]} : vector<49x288xf32> to vector<49x32xf32>
    %87 = arith.addf %85, %86 : vector<49x32xf32>
    %88 = vector.extract_strided_slice %54 {offsets = [0, 160], sizes = [49, 32], strides = [1, 1]} : vector<49x288xf32> to vector<49x32xf32>
    %89 = vector.extract_strided_slice %88 {offsets = [1, 0], sizes = [48, 32], strides = [1, 1]} : vector<49x32xf32> to vector<48x32xf32>
    %cst_36 = arith.constant 0.000000e+00 : f32
    %90 = vector.broadcast %cst_36 : f32 to vector<1x32xf32>
    %91 = tpu.concatenate %89, %90 in 0 : vector<48x32xf32>, vector<1x32xf32> -> vector<49x32xf32>
    %92 = vector.broadcast %58 : vector<49x1xf32> to vector<49x32xf32>
    %93 = arith.mulf %91, %92 : vector<49x32xf32>
    %94 = arith.addf %87, %93 : vector<49x32xf32>
    %95 = vector.extract_strided_slice %54 {offsets = [0, 192], sizes = [49, 32], strides = [1, 1]} : vector<49x288xf32> to vector<49x32xf32>
    %96 = vector.extract_strided_slice %95 {offsets = [6, 0], sizes = [43, 32], strides = [1, 1]} : vector<49x32xf32> to vector<43x32xf32>
    %cst_37 = arith.constant 0.000000e+00 : f32
    %97 = vector.broadcast %cst_37 : f32 to vector<6x32xf32>
    %98 = tpu.concatenate %96, %97 in 0 : vector<43x32xf32>, vector<6x32xf32> -> vector<49x32xf32>
    %99 = vector.broadcast %56 : vector<49x1xf32> to vector<49x32xf32>
    %100 = arith.mulf %98, %99 : vector<49x32xf32>
    %101 = arith.addf %94, %100 : vector<49x32xf32>
    %102 = vector.extract_strided_slice %54 {offsets = [0, 224], sizes = [49, 32], strides = [1, 1]} : vector<49x288xf32> to vector<49x32xf32>
    %103 = vector.extract_strided_slice %102 {offsets = [7, 0], sizes = [42, 32], strides = [1, 1]} : vector<49x32xf32> to vector<42x32xf32>
    %cst_38 = arith.constant 0.000000e+00 : f32
    %104 = vector.broadcast %cst_38 : f32 to vector<7x32xf32>
    %105 = tpu.concatenate %103, %104 in 0 : vector<42x32xf32>, vector<7x32xf32> -> vector<49x32xf32>
    %106 = arith.addf %101, %105 : vector<49x32xf32>
    %107 = vector.extract_strided_slice %54 {offsets = [0, 256], sizes = [49, 32], strides = [1, 1]} : vector<49x288xf32> to vector<49x32xf32>
    %108 = vector.extract_strided_slice %107 {offsets = [8, 0], sizes = [41, 32], strides = [1, 1]} : vector<49x32xf32> to vector<41x32xf32>
    %cst_39 = arith.constant 0.000000e+00 : f32
    %109 = vector.broadcast %cst_39 : f32 to vector<8x32xf32>
    %110 = tpu.concatenate %108, %109 in 0 : vector<41x32xf32>, vector<8x32xf32> -> vector<49x32xf32>
    %111 = vector.broadcast %58 : vector<49x1xf32> to vector<49x32xf32>
    %112 = arith.mulf %110, %111 : vector<49x32xf32>
    %113 = arith.addf %106, %112 : vector<49x32xf32>
    %c0_40 = arith.constant 0 : index
    %c0_41 = arith.constant 0 : index
    %114 = vector.load %arg8[%c0_40, %c0_41] : memref<49x32xf32, #tpu.memory_space<vmem>>, vector<49x32xf32>
    tpu.vector_store %arg8[%c0_40, %c0_41], %113 {strides = array<i32>} : memref<49x32xf32, #tpu.memory_space<vmem>>, vector<49x32xf32>,
    return
  }
}

</mosaic_0001>

<llo_original>
// kernel: fused_forward.1
$region0: #{fused_forward.1}
  #allocation0 [shape = 'u32[]', space=smem, size = 0x4, offset = 0x4, fixed_abs, tag = 'smem constant byte address 0x4 - core index']
  #allocation1 [shape = 'u32[144,128]{1,0:T(1,128)}', space=vmem, size = 0x12000, scoped, tag = 'internal scratch']
  %s0 = inlined_call_operand.vmem [shape: f32[49,1536], index: 0, kind: input, shape index: {}]
  %s1 = inlined_call_operand.vmem [shape: f32[1,1536], index: 1, kind: input, shape index: {}]
  %s2 = inlined_call_operand.vmem [shape: f32[1,1536], index: 2, kind: input, shape index: {}]
  %s3 = inlined_call_operand.vmem [shape: f32[1536,128], index: 3, kind: input, shape index: {}]
  %s4 = inlined_call_operand.vmem [shape: f32[1,128], index: 4, kind: input, shape index: {}]
  %s5 = inlined_call_operand.vmem [shape: f32[1,128], index: 5, kind: input, shape index: {}]
  %s6 = inlined_call_operand.vmem [shape: f32[128,288], index: 6, kind: input, shape index: {}]
  %s7 = inlined_call_operand.vmem [shape: f32[2,49,1], index: 7, kind: input, shape index: {}]
  %s8 = inlined_call_operand.vmem [shape: f32[49,32], index: 8, kind: output, shape index: {}]
  %s9 = sld [smem:[#allocation0]]
  $region42: #{fused_forward.1} parent=0
    _
  %s11 = ssub.s32 1, %s9
  %s12 = scalar_select 0, %s11, %s9
  // Predicated region
  $region2: #{fused_forward.1} parent=0 // pred_check
    _
  $region3: #{fused_forward.1} parent=0 // pred_check_branch
    %14 = sbr.rel (0) target = $region5
  $region4: #{fused_forward.1} parent=0 // pred_region
    _
  $region5: #{fused_forward.1} parent=0 // pred_fallthru
    _
  // Predicated region
  $region6: #{fused_forward.1} parent=0 // pred_check
    _
  $region7: #{fused_forward.1} parent=0 // pred_check_branch
    %16 = sbr.rel (0) target = $region9
  $region8: #{fused_forward.1} parent=0 // pred_region
    _
  $region9: #{fused_forward.1} parent=0 // pred_fallthru
    _
  // Predicated region
  $region10: #{fused_forward.1} parent=0 // pred_check
    _
  $region11: #{fused_forward.1} parent=0 // pred_check_branch
    %18 = sbr.rel (0) target = $region13
  $region12: #{fused_forward.1} parent=0 // pred_region
    _
  $region13: #{fused_forward.1} parent=0 // pred_fallthru
    _
  // Predicated region
  $region14: #{fused_forward.1} parent=0 // pred_check
    _
  $region15: #{fused_forward.1} parent=0 // pred_check_branch
    %20 = sbr.rel (0) target = $region17
  $region16: #{fused_forward.1} parent=0 // pred_region
    _
  $region17: #{fused_forward.1} parent=0 // pred_fallthru
    _
  // Predicated region
  $region18: #{fused_forward.1} parent=0 // pred_check
    _
  $region19: #{fused_forward.1} parent=0 // pred_check_branch
    %22 = sbr.rel (0) target = $region21
  $region20: #{fused_forward.1} parent=0 // pred_region
    _
  $region21: #{fused_forward.1} parent=0 // pred_fallthru
    _
  // Predicated region
  $region22: #{fused_forward.1} parent=0 // pred_check
    _
  $region23: #{fused_forward.1} parent=0 // pred_check_branch
    %24 = sbr.rel (0) target = $region25
  $region24: #{fused_forward.1} parent=0 // pred_region
    _
  $region25: #{fused_forward.1} parent=0 // pred_fallthru
    _
  // Predicated region
  $region26: #{fused_forward.1} parent=0 // pred_check
    _
  $region27: #{fused_forward.1} parent=0 // pred_check_branch
    %26 = sbr.rel (0) target = $region29
  $region28: #{fused_forward.1} parent=0 // pred_region
    _
  $region29: #{fused_forward.1} parent=0 // pred_fallthru
    _
  // Predicated region
  $region30: #{fused_forward.1} parent=0 // pred_check
    _
  $region31: #{fused_forward.1} parent=0 // pred_check_branch
    %28 = sbr.rel (0) target = $region33
  $region32: #{fused_forward.1} parent=0 // pred_region
    _
  $region33: #{fused_forward.1} parent=0 // pred_fallthru
    _
  %v29 = vld [vmem:[%s0] sm:$0xff]
  %v30 = vld [vmem:[%s0 + $0x8] sm:$0xff]
  %v31 = vld [vmem:[%s0 + $0x10] sm:$0xff]
  %v32 = vld [vmem:[%s0 + $0x18] sm:$0xff]
  %v33 = vld [vmem:[%s0 + $0x20] sm:$0xff]
  %v34 = vld [vmem:[%s0 + $0x28] sm:$0xff]
  %v35 = vld [vmem:[%s0 + $0x30] sm:$0xff]
  %v36 = vld [vmem:[%s0 + $0x38] sm:$0xff]
  %v37 = vld [vmem:[%s0 + $0x40] sm:$0xff]
  %v38 = vld [vmem:[%s0 + $0x48] sm:$0xff]
  %v39 = vld [vmem:[%s0 + $0x50] sm:$0xff]
  %v40 = vld [vmem:[%s0 + $0x58] sm:$0xff]
  %v41 = vld [vmem:[%s0 + $0x60] sm:$0xff]
  %v42 = vld [vmem:[%s0 + $0x68] sm:$0xff]
  %v43 = vld [vmem:[%s0 + $0x70] sm:$0xff]
  %v44 = vld [vmem:[%s0 + $0x78] sm:$0xff]
  %v45 = vld [vmem:[%s0 + $0x80] sm:$0xff]
  %v46 = vld [vmem:[%s0 + $0x88] sm:$0xff]
  %v47 = vld [vmem:[%s0 + $0x90] sm:$0xff]
  %v48 = vld [vmem:[%s0 + $0x98] sm:$0xff]
  %v49 = vld [vmem:[%s0 + $0xa0] sm:$0xff]
  %v50 = vld [vmem:[%s0 + $0xa8] sm:$0xff]
  %v51 = vld [vmem:[%s0 + $0xb0] sm:$0xff]
  %v52 = vld [vmem:[%s0 + $0xb8] sm:$0xff]
  %v53 = vld [vmem:[%s0 + $0xc0] sm:$0xff]
  %v54 = vld [vmem:[%s0 + $0xc8] sm:$0xff]
  %v55 = vld [vmem:[%s0 + $0xd0] sm:$0xff]
  %v56 = vld [vmem:[%s0 + $0xd8] sm:$0xff]
  %v57 = vld [vmem:[%s0 + $0xe0] sm:$0xff]
  %v58 = vld [vmem:[%s0 + $0xe8] sm:$0xff]
  %v59 = vld [vmem:[%s0 + $0xf0] sm:$0xff]
  %v60 = vld [vmem:[%s0 + $0xf8] sm:$0xff]
  %v61 = vld [vmem:[%s0 + $0x100] sm:$0xff]
  %v62 = vld [vmem:[%s0 + $0x108] sm:$0xff]
  %v63 = vld [vmem:[%s0 + $0x110] sm:$0xff]
  %v64 = vld [vmem:[%s0 + $0x118] sm:$0xff]
  %v65 = vld [vmem:[%s0 + $0x120] sm:$0xff]
  %v66 = vld [vmem:[%s0 + $0x128] sm:$0xff]
  %v67 = vld [vmem:[%s0 + $0x130] sm:$0xff]
  %v68 = vld [vmem:[%s0 + $0x138] sm:$0xff]
  %v69 = vld [vmem:[%s0 + $0x140] sm:$0xff]
  %v70 = vld [vmem:[%s0 + $0x148] sm:$0xff]
  %v71 = vld [vmem:[%s0 + $0x150] sm:$0xff]
  %v72 = vld [vmem:[%s0 + $0x158] sm:$0xff]
  %v73 = vld [vmem:[%s0 + $0x160] sm:$0xff]
  %v74 = vld [vmem:[%s0 + $0x168] sm:$0xff]
  %v75 = vld [vmem:[%s0 + $0x170] sm:$0xff]
  %v76 = vld [vmem:[%s0 + $0x178] sm:$0xff]
  %v77 = vld [vmem:[%s0 + $0x180] sm:$0xff]
  %v78 = vld [vmem:[%s0 + $0x188] sm:$0xff]
  %v79 = vld [vmem:[%s0 + $0x190] sm:$0xff]
  %v80 = vld [vmem:[%s0 + $0x198] sm:$0xff]
  %v81 = vld [vmem:[%s0 + $0x1a0] sm:$0xff]
  %v82 = vld [vmem:[%s0 + $0x1a8] sm:$0xff]
  %v83 = vld [vmem:[%s0 + $0x1b0] sm:$0xff]
  %v84 = vld [vmem:[%s0 + $0x1b8] sm:$0xff]
  %v85 = vld [vmem:[%s0 + $0x1c0] sm:$0xff]
  %v86 = vld [vmem:[%s0 + $0x1c8] sm:$0xff]
  %v87 = vld [vmem:[%s0 + $0x1d0] sm:$0xff]
  %v88 = vld [vmem:[%s0 + $0x1d8] sm:$0xff]
  %v89 = vld [vmem:[%s0 + $0x1e0] sm:$0xff]
  %v90 = vld [vmem:[%s0 + $0x1e8] sm:$0xff]
  %v91 = vld [vmem:[%s0 + $0x1f0] sm:$0xff]
  %v92 = vld [vmem:[%s0 + $0x1f8] sm:$0xff]
  %v93 = vld [vmem:[%s0 + $0x200] sm:$0xff]
  %v94 = vld [vmem:[%s0 + $0x208] sm:$0xff]
  %v95 = vld [vmem:[%s0 + $0x210] sm:$0xff]
  %v96 = vld [vmem:[%s0 + $0x218] sm:$0xff]
  %v97 = vld [vmem:[%s0 + $0x220] sm:$0xff]
  %v98 = vld [vmem:[%s0 + $0x228] sm:$0xff]
  %v99 = vld [vmem:[%s0 + $0x230] sm:$0xff]
  %v100 = vld [vmem:[%s0 + $0x238] sm:$0xff]
  %v101 = vld [vmem:[%s0 + $0x240] sm:$0x1]
  %v102 = vld [vmem:[%s0 + $0x248] sm:$0x1]
  %v103 = vld [vmem:[%s0 + $0x250] sm:$0x1]
  %v104 = vld [vmem:[%s0 + $0x258] sm:$0x1]
  %v105 = vld [vmem:[%s0 + $0x260] sm:$0x1]
  %v106 = vld [vmem:[%s0 + $0x268] sm:$0x1]
  %v107 = vld [vmem:[%s0 + $0x270] sm:$0x1]
  %v108 = vld [vmem:[%s0 + $0x278] sm:$0x1]
  %v109 = vld [vmem:[%s0 + $0x280] sm:$0x1]
  %v110 = vld [vmem:[%s0 + $0x288] sm:$0x1]
  %v111 = vld [vmem:[%s0 + $0x290] sm:$0x1]
  %v112 = vld [vmem:[%s0 + $0x298] sm:$0x1]
  %v113 = vadd.f32 %v29, %v41
  %v114 = vadd.f32 %v113, %v53
  %v115 = vadd.f32 %v114, %v65
  %v116 = vadd.f32 %v115, %v77
  %v117 = vadd.f32 %v116, %v89
  %vm118 = vcmask 1040384
  %v119 = vsel %vm118, %v101, 0.0
  %v120 = vadd.f32 %v117, %v119
  %v121 = vrot.slane %v120, 4
  %v122 = vadd.f32 %v120, %v121
  %v123 = vrot.slane %v122, 2
  %v124 = vadd.f32 %v122, %v123
  %v125 = vrot.slane %v124, 1
  %v126 = vadd.f32 %v124, %v125
  %v127 = vadd.f32 %v30, %v42
  %v128 = vadd.f32 %v127, %v54
  %v129 = vadd.f32 %v128, %v66
  %v130 = vadd.f32 %v129, %v78
  %v131 = vadd.f32 %v130, %v90
  %v132 = vsel %vm118, %v102, 0.0
  %v133 = vadd.f32 %v131, %v132
  %v134 = vrot.slane %v133, 4
  %v135 = vadd.f32 %v133, %v134
  %v136 = vrot.slane %v135, 2
  %v137 = vadd.f32 %v135, %v136
  %v138 = vrot.slane %v137, 1
  %v139 = vadd.f32 %v137, %v138
  %v140 = vadd.f32 %v31, %v43
  %v141 = vadd.f32 %v140, %v55
  %v142 = vadd.f32 %v141, %v67
  %v143 = vadd.f32 %v142, %v79
  %v144 = vadd.f32 %v143, %v91
  %v145 = vsel %vm118, %v103, 0.0
  %v146 = vadd.f32 %v144, %v145
  %v147 = vrot.slane %v146, 4
  %v148 = vadd.f32 %v146, %v147
  %v149 = vrot.slane %v148, 2
  %v150 = vadd.f32 %v148, %v149
  %v151 = vrot.slane %v150, 1
  %v152 = vadd.f32 %v150, %v151
  %v153 = vadd.f32 %v32, %v44
  %v154 = vadd.f32 %v153, %v56
  %v155 = vadd.f32 %v154, %v68
  %v156 = vadd.f32 %v155, %v80
  %v157 = vadd.f32 %v156, %v92
  %v158 = vsel %vm118, %v104, 0.0
  %v159 = vadd.f32 %v157, %v158
  %v160 = vrot.slane %v159, 4
  %v161 = vadd.f32 %v159, %v160
  %v162 = vrot.slane %v161, 2
  %v163 = vadd.f32 %v161, %v162
  %v164 = vrot.slane %v163, 1
  %v165 = vadd.f32 %v163, %v164
  %v166 = vadd.f32 %v33, %v45
  %v167 = vadd.f32 %v166, %v57
  %v168 = vadd.f32 %v167, %v69
  %v169 = vadd.f32 %v168, %v81
  %v170 = vadd.f32 %v169, %v93
  %v171 = vsel %vm118, %v105, 0.0
  %v172 = vadd.f32 %v170, %v171
  %v173 = vrot.slane %v172, 4
  %v174 = vadd.f32 %v172, %v173
  %v175 = vrot.slane %v174, 2
  %v176 = vadd.f32 %v174, %v175
  %v177 = vrot.slane %v176, 1
  %v178 = vadd.f32 %v176, %v177
  %v179 = vadd.f32 %v34, %v46
  %v180 = vadd.f32 %v179, %v58
  %v181 = vadd.f32 %v180, %v70
  %v182 = vadd.f32 %v181, %v82
  %v183 = vadd.f32 %v182, %v94
  %v184 = vsel %vm118, %v106, 0.0
  %v185 = vadd.f32 %v183, %v184
  %v186 = vrot.slane %v185, 4
  %v187 = vadd.f32 %v185, %v186
  %v188 = vrot.slane %v187, 2
  %v189 = vadd.f32 %v187, %v188
  %v190 = vrot.slane %v189, 1
  %v191 = vadd.f32 %v189, %v190
  %v192 = vadd.f32 %v35, %v47
  %v193 = vadd.f32 %v192, %v59
  %v194 = vadd.f32 %v193, %v71
  %v195 = vadd.f32 %v194, %v83
  %v196 = vadd.f32 %v195, %v95
  %v197 = vsel %vm118, %v107, 0.0
  %v198 = vadd.f32 %v196, %v197
  %v199 = vrot.slane %v198, 4
  %v200 = vadd.f32 %v198, %v199
  %v201 = vrot.slane %v200, 2
  %v202 = vadd.f32 %v200, %v201
  %v203 = vrot.slane %v202, 1
  %v204 = vadd.f32 %v202, %v203
  %v205 = vadd.f32 %v36, %v48
  %v206 = vadd.f32 %v205, %v60
  %v207 = vadd.f32 %v206, %v72
  %v208 = vadd.f32 %v207, %v84
  %v209 = vadd.f32 %v208, %v96
  %v210 = vsel %vm118, %v108, 0.0
  %v211 = vadd.f32 %v209, %v210
  %v212 = vrot.slane %v211, 4
  %v213 = vadd.f32 %v211, %v212
  %v214 = vrot.slane %v213, 2
  %v215 = vadd.f32 %v213, %v214
  %v216 = vrot.slane %v215, 1
  %v217 = vadd.f32 %v215, %v216
  %v218 = vadd.f32 %v37, %v49
  %v219 = vadd.f32 %v218, %v61
  %v220 = vadd.f32 %v219, %v73
  %v221 = vadd.f32 %v220, %v85
  %v222 = vadd.f32 %v221, %v97
  %v223 = vsel %vm118, %v109, 0.0
  %v224 = vadd.f32 %v222, %v223
  %v225 = vrot.slane %v224, 4
  %v226 = vadd.f32 %v224, %v225
  %v227 = vrot.slane %v226, 2
  %v228 = vadd.f32 %v226, %v227
  %v229 = vrot.slane %v228, 1
  %v230 = vadd.f32 %v228, %v229
  %v231 = vadd.f32 %v38, %v50
  %v232 = vadd.f32 %v231, %v62
  %v233 = vadd.f32 %v232, %v74
  %v234 = vadd.f32 %v233, %v86
  %v235 = vadd.f32 %v234, %v98
  %v236 = vsel %vm118, %v110, 0.0
  %v237 = vadd.f32 %v235, %v236
  %v238 = vrot.slane %v237, 4
  %v239 = vadd.f32 %v237, %v238
  %v240 = vrot.slane %v239, 2
  %v241 = vadd.f32 %v239, %v240
  %v242 = vrot.slane %v241, 1
  %v243 = vadd.f32 %v241, %v242
  %v244 = vadd.f32 %v39, %v51
  %v245 = vadd.f32 %v244, %v63
  %v246 = vadd.f32 %v245, %v75
  %v247 = vadd.f32 %v246, %v87
  %v248 = vadd.f32 %v247, %v99
  %v249 = vsel %vm118, %v111, 0.0
  %v250 = vadd.f32 %v248, %v249
  %v251 = vrot.slane %v250, 4
  %v252 = vadd.f32 %v250, %v251
  %v253 = vrot.slane %v252, 2
  %v254 = vadd.f32 %v252, %v253
  %v255 = vrot.slane %v254, 1
  %v256 = vadd.f32 %v254, %v255
  %v257 = vadd.f32 %v40, %v52
  %v258 = vadd.f32 %v257, %v64
  %v259 = vadd.f32 %v258, %v76
  %v260 = vadd.f32 %v259, %v88
  %v261 = vadd.f32 %v260, %v100
  %v262 = vsel %vm118, %v112, 0.0
  %v263 = vadd.f32 %v261, %v262
  %v264 = vrot.slane %v263, 4
  %v265 = vadd.f32 %v263, %v264
  %v266 = vrot.slane %v265, 2
  %v267 = vadd.f32 %v265, %v266
  %v268 = vrot.slane %v267, 1
  %v269 = vadd.f32 %v267, %v268
  %v270 = vmul.f32 %v29, %v29
  %v271 = vmul.f32 %v30, %v30
  %v272 = vmul.f32 %v31, %v31
  %v273 = vmul.f32 %v32, %v32
  %v274 = vmul.f32 %v33, %v33
  %v275 = vmul.f32 %v34, %v34
  %v276 = vmul.f32 %v35, %v35
  %v277 = vmul.f32 %v36, %v36
  %v278 = vmul.f32 %v37, %v37
  %v279 = vmul.f32 %v38, %v38
  %v280 = vmul.f32 %v39, %v39
  %v281 = vmul.f32 %v40, %v40
  %v282 = vmul.f32 %v41, %v41
  %v283 = vmul.f32 %v42, %v42
  %v284 = vmul.f32 %v43, %v43
  %v285 = vmul.f32 %v44, %v44
  %v286 = vmul.f32 %v45, %v45
  %v287 = vmul.f32 %v46, %v46
  %v288 = vmul.f32 %v47, %v47
  %v289 = vmul.f32 %v48, %v48
  %v290 = vmul.f32 %v49, %v49
  %v291 = vmul.f32 %v50, %v50
  %v292 = vmul.f32 %v51, %v51
  %v293 = vmul.f32 %v52, %v52
  %v294 = vmul.f32 %v53, %v53
  %v295 = vmul.f32 %v54, %v54
  %v296 = vmul.f32 %v55, %v55
  %v297 = vmul.f32 %v56, %v56
  %v298 = vmul.f32 %v57, %v57
  %v299 = vmul.f32 %v58, %v58
  %v300 = vmul.f32 %v59, %v59
  %v301 = vmul.f32 %v60, %v60
  %v302 = vmul.f32 %v61, %v61
  %v303 = vmul.f32 %v62, %v62
  %v304 = vmul.f32 %v63, %v63
  %v305 = vmul.f32 %v64, %v64
  %v306 = vmul.f32 %v65, %v65
  %v307 = vmul.f32 %v66, %v66
  %v308 = vmul.f32 %v67, %v67
  %v309 = vmul.f32 %v68, %v68
  %v310 = vmul.f32 %v69, %v69
  %v311 = vmul.f32 %v70, %v70
  %v312 = vmul.f32 %v71, %v71
  %v313 = vmul.f32 %v72, %v72
  %v314 = vmul.f32 %v73, %v73
  %v315 = vmul.f32 %v74, %v74
  %v316 = vmul.f32 %v75, %v75
  %v317 = vmul.f32 %v76, %v76
  %v318 = vmul.f32 %v77, %v77
  %v319 = vmul.f32 %v78, %v78
  %v320 = vmul.f32 %v79, %v79
  %v321 = vmul.f32 %v80, %v80
  %v322 = vmul.f32 %v81, %v81
  %v323 = vmul.f32 %v82, %v82
  %v324 = vmul.f32 %v83, %v83
  %v325 = vmul.f32 %v84, %v84
  %v326 = vmul.f32 %v85, %v85
  %v327 = vmul.f32 %v86, %v86
  %v328 = vmul.f32 %v87, %v87
  %v329 = vmul.f32 %v88, %v88
  %v330 = vmul.f32 %v89, %v89
  %v331 = vmul.f32 %v90, %v90
  %v332 = vmul.f32 %v91, %v91
  %v333 = vmul.f32 %v92, %v92
  %v334 = vmul.f32 %v93, %v93
  %v335 = vmul.f32 %v94, %v94
  %v336 = vmul.f32 %v95, %v95
  %v337 = vmul.f32 %v96, %v96
  %v338 = vmul.f32 %v97, %v97
  %v339 = vmul.f32 %v98, %v98
  %v340 = vmul.f32 %v99, %v99
  %v341 = vmul.f32 %v100, %v100
  %v342 = vmul.f32 %v101, %v101
  %v343 = vmul.f32 %v102, %v102
  %v344 = vmul.f32 %v103, %v103
  %v345 = vmul.f32 %v104, %v104
  %v346 = vmul.f32 %v105, %v105
  %v347 = vmul.f32 %v106, %v106
  %v348 = vmul.f32 %v107, %v107
  %v349 = vmul.f32 %v108, %v108
  %v350 = vmul.f32 %v109, %v109
  %v351 = vmul.f32 %v110, %v110
  %v352 = vmul.f32 %v111, %v111
  %v353 = vmul.f32 %v112, %v112
  %v354 = vadd.f32 %v270, %v282
  %v355 = vadd.f32 %v354, %v294
  %v356 = vadd.f32 %v355, %v306
  %v357 = vadd.f32 %v356, %v318
  %v358 = vadd.f32 %v357, %v330
  %v359 = vsel %vm118, %v342, 0.0
  %v360 = vadd.f32 %v358, %v359
  %v361 = vrot.slane %v360, 4
  %v362 = vadd.f32 %v360, %v361
  %v363 = vrot.slane %v362, 2
  %v364 = vadd.f32 %v362, %v363
  %v365 = vrot.slane %v364, 1
  %v366 = vadd.f32 %v364, %v365
  %v367 = vadd.f32 %v271, %v283
  %v368 = vadd.f32 %v367, %v295
  %v369 = vadd.f32 %v368, %v307
  %v370 = vadd.f32 %v369, %v319
  %v371 = vadd.f32 %v370, %v331
  %v372 = vsel %vm118, %v343, 0.0
  %v373 = vadd.f32 %v371, %v372
  %v374 = vrot.slane %v373, 4
  %v375 = vadd.f32 %v373, %v374
  %v376 = vrot.slane %v375, 2
  %v377 = vadd.f32 %v375, %v376
  %v378 = vrot.slane %v377, 1
  %v379 = vadd.f32 %v377, %v378
  %v380 = vadd.f32 %v272, %v284
  %v381 = vadd.f32 %v380, %v296
  %v382 = vadd.f32 %v381, %v308
  %v383 = vadd.f32 %v382, %v320
  %v384 = vadd.f32 %v383, %v332
  %v385 = vsel %vm118, %v344, 0.0
  %v386 = vadd.f32 %v384, %v385
  %v387 = vrot.slane %v386, 4
  %v388 = vadd.f32 %v386, %v387
  %v389 = vrot.slane %v388, 2
  %v390 = vadd.f32 %v388, %v389
  %v391 = vrot.slane %v390, 1
  %v392 = vadd.f32 %v390, %v391
  %v393 = vadd.f32 %v273, %v285
  %v394 = vadd.f32 %v393, %v297
  %v395 = vadd.f32 %v394, %v309
  %v396 = vadd.f32 %v395, %v321
  %v397 = vadd.f32 %v396, %v333
  %v398 = vsel %vm118, %v345, 0.0
  %v399 = vadd.f32 %v397, %v398
  %v400 = vrot.slane %v399, 4
  %v401 = vadd.f32 %v399, %v400
  %v402 = vrot.slane %v401, 2
  %v403 = vadd.f32 %v401, %v402
  %v404 = vrot.slane %v403, 1
  %v405 = vadd.f32 %v403, %v404
  %v406 = vadd.f32 %v274, %v286
  %v407 = vadd.f32 %v406, %v298
  %v408 = vadd.f32 %v407, %v310
  %v409 = vadd.f32 %v408, %v322
  %v410 = vadd.f32 %v409, %v334
  %v411 = vsel %vm118, %v346, 0.0
  %v412 = vadd.f32 %v410, %v411
  %v413 = vrot.slane %v412, 4
  %v414 = vadd.f32 %v412, %v413
  %v415 = vrot.slane %v414, 2
  %v416 = vadd.f32 %v414, %v415
  %v417 = vrot.slane %v416, 1
  %v418 = vadd.f32 %v416, %v417
  %v419 = vadd.f32 %v275, %v287
  %v420 = vadd.f32 %v419, %v299
  %v421 = vadd.f32 %v420, %v311
  %v422 = vadd.f32 %v421, %v323
  %v423 = vadd.f32 %v422, %v335
  %v424 = vsel %vm118, %v347, 0.0
  %v425 = vadd.f32 %v423, %v424
  %v426 = vrot.slane %v425, 4
  %v427 = vadd.f32 %v425, %v426
  %v428 = vrot.slane %v427, 2
  %v429 = vadd.f32 %v427, %v428
  %v430 = vrot.slane %v429, 1
  %v431 = vadd.f32 %v429, %v430
  %v432 = vadd.f32 %v276, %v288
  %v433 = vadd.f32 %v432, %v300
  %v434 = vadd.f32 %v433, %v312
  %v435 = vadd.f32 %v434, %v324
  %v436 = vadd.f32 %v435, %v336
  %v437 = vsel %vm118, %v348, 0.0
  %v438 = vadd.f32 %v436, %v437
  %v439 = vrot.slane %v438, 4
  %v440 = vadd.f32 %v438, %v439
  %v441 = vrot.slane %v440, 2
  %v442 = vadd.f32 %v440, %v441
  %v443 = vrot.slane %v442, 1
  %v444 = vadd.f32 %v442, %v443
  %v445 = vadd.f32 %v277, %v289
  %v446 = vadd.f32 %v445, %v301
  %v447 = vadd.f32 %v446, %v313
  %v448 = vadd.f32 %v447, %v325
  %v449 = vadd.f32 %v448, %v337
  %v450 = vsel %vm118, %v349, 0.0
  %v451 = vadd.f32 %v449, %v450
  %v452 = vrot.slane %v451, 4
  %v453 = vadd.f32 %v451, %v452
  %v454 = vrot.slane %v453, 2
  %v455 = vadd.f32 %v453, %v454
  %v456 = vrot.slane %v455, 1
  %v457 = vadd.f32 %v455, %v456
  %v458 = vadd.f32 %v278, %v290
  %v459 = vadd.f32 %v458, %v302
  %v460 = vadd.f32 %v459, %v314
  %v461 = vadd.f32 %v460, %v326
  %v462 = vadd.f32 %v461, %v338
  %v463 = vsel %vm118, %v350, 0.0
  %v464 = vadd.f32 %v462, %v463
  %v465 = vrot.slane %v464, 4
  %v466 = vadd.f32 %v464, %v465
  %v467 = vrot.slane %v466, 2
  %v468 = vadd.f32 %v466, %v467
  %v469 = vrot.slane %v468, 1
  %v470 = vadd.f32 %v468, %v469
  %v471 = vadd.f32 %v279, %v291
  %v472 = vadd.f32 %v471, %v303
  %v473 = vadd.f32 %v472, %v315
  %v474 = vadd.f32 %v473, %v327
  %v475 = vadd.f32 %v474, %v339
  %v476 = vsel %vm118, %v351, 0.0
  %v477 = vadd.f32 %v475, %v476
  %v478 = vrot.slane %v477, 4
  %v479 = vadd.f32 %v477, %v478
  %v480 = vrot.slane %v479, 2
  %v481 = vadd.f32 %v479, %v480
  %v482 = vrot.slane %v481, 1
  %v483 = vadd.f32 %v481, %v482
  %v484 = vadd.f32 %v280, %v292
  %v485 = vadd.f32 %v484, %v304
  %v486 = vadd.f32 %v485, %v316
  %v487 = vadd.f32 %v486, %v328
  %v488 = vadd.f32 %v487, %v340
  %v489 = vsel %vm118, %v352, 0.0
  %v490 = vadd.f32 %v488, %v489
  %v491 = vrot.slane %v490, 4
  %v492 = vadd.f32 %v490, %v491
  %v493 = vrot.slane %v492, 2
  %v494 = vadd.f32 %v492, %v493
  %v495 = vrot.slane %v494, 1
  %v496 = vadd.f32 %v494, %v495
  %v497 = vadd.f32 %v281, %v293
  %v498 = vadd.f32 %v497, %v305
  %v499 = vadd.f32 %v498, %v317
  %v500 = vadd.f32 %v499, %v329
  %v501 = vadd.f32 %v500, %v341
  %v502 = vsel %vm118, %v353, 0.0
  %v503 = vadd.f32 %v501, %v502
  %v504 = vrot.slane %v503, 4
  %v505 = vadd.f32 %v503, %v504
  %v506 = vrot.slane %v505, 2
  %v507 = vadd.f32 %v505, %v506
  %v508 = vrot.slane %v507, 1
  %v509 = vadd.f32 %v507, %v508
  %v510 = vmul.f32 %v126, 0.020408163
  %v511 = vmul.f32 %v139, 0.020408163
  %v512 = vmul.f32 %v152, 0.020408163
  %v513 = vmul.f32 %v165, 0.020408163
  %v514 = vmul.f32 %v178, 0.020408163
  %v515 = vmul.f32 %v191, 0.020408163
  %v516 = vmul.f32 %v204, 0.020408163
  %v517 = vmul.f32 %v217, 0.020408163
  %v518 = vmul.f32 %v230, 0.020408163
  %v519 = vmul.f32 %v243, 0.020408163
  %v520 = vmul.f32 %v256, 0.020408163
  %v521 = vmul.f32 %v269, 0.020408163
  %v522 = vmul.f32 %v366, 0.020408163
  %v523 = vmul.f32 %v379, 0.020408163
  %v524 = vmul.f32 %v392, 0.020408163
  %v525 = vmul.f32 %v405, 0.020408163
  %v526 = vmul.f32 %v418, 0.020408163
  %v527 = vmul.f32 %v431, 0.020408163
  %v528 = vmul.f32 %v444, 0.020408163
  %v529 = vmul.f32 %v457, 0.020408163
  %v530 = vmul.f32 %v470, 0.020408163
  %v531 = vmul.f32 %v483, 0.020408163
  %v532 = vmul.f32 %v496, 0.020408163
  %v533 = vmul.f32 %v509, 0.020408163
  %v534 = vmul.f32 %v510, %v510
  %v535 = vmul.f32 %v511, %v511
  %v536 = vmul.f32 %v512, %v512
  %v537 = vmul.f32 %v513, %v513
  %v538 = vmul.f32 %v514, %v514
  %v539 = vmul.f32 %v515, %v515
  %v540 = vmul.f32 %v516, %v516
  %v541 = vmul.f32 %v517, %v517
  %v542 = vmul.f32 %v518, %v518
  %v543 = vmul.f32 %v519, %v519
  %v544 = vmul.f32 %v520, %v520
  %v545 = vmul.f32 %v521, %v521
  %v546 = vsub.f32 %v522, %v534
  %v547 = vsub.f32 %v523, %v535
  %v548 = vsub.f32 %v524, %v536
  %v549 = vsub.f32 %v525, %v537
  %v550 = vsub.f32 %v526, %v538
  %v551 = vsub.f32 %v527, %v539
  %v552 = vsub.f32 %v528, %v540
  %v553 = vsub.f32 %v529, %v541
  %v554 = vsub.f32 %v530, %v542
  %v555 = vsub.f32 %v531, %v543
  %v556 = vsub.f32 %v532, %v544
  %v557 = vsub.f32 %v533, %v545
  %v558 = vadd.f32 %v546, 1e-05
  %v559 = vadd.f32 %v547, 1e-05
  %v560 = vadd.f32 %v548, 1e-05
  %v561 = vadd.f32 %v549, 1e-05
  %v562 = vadd.f32 %v550, 1e-05
  %v563 = vadd.f32 %v551, 1e-05
  %v564 = vadd.f32 %v552, 1e-05
  %v565 = vadd.f32 %v553, 1e-05
  %v566 = vadd.f32 %v554, 1e-05
  %v567 = vadd.f32 %v555, 1e-05
  %v568 = vadd.f32 %v556, 1e-05
  %v569 = vadd.f32 %v557, 1e-05
  %v570 = vrsqrt.pop %v558
  %v571 = vrsqrt.pop %v559
  %v572 = vrsqrt.pop %v560
  %v573 = vrsqrt.pop %v561
  %v574 = vrsqrt.pop %v562
  %v575 = vrsqrt.pop %v563
  %v576 = vrsqrt.pop %v564
  %v577 = vrsqrt.pop %v565
  %v578 = vrsqrt.pop %v566
  %v579 = vrsqrt.pop %v567
  %v580 = vrsqrt.pop %v568
  %v581 = vrsqrt.pop %v569
  %v582 = vld [vmem:[%s1] sm:$0xff]
  %v583 = vld [vmem:[%s1 + $0x8] sm:$0xf]
  %v586 = vlaneseq
  %v587 = vshrl.u32 %v586, 7
  %v588 = vsub.s32 0, %v587
  %v589 = vrot.slane %v582, %v588
  %v590 = vlaneseq
  %v591 = vshrl.u32 %v590, 7
  %v592 = vsub.s32 1, %v591
  %v593 = vrot.slane %v582, %v592
  %v594 = vlaneseq
  %v595 = vshrl.u32 %v594, 7
  %v596 = vsub.s32 2, %v595
  %v597 = vrot.slane %v582, %v596
  %v598 = vlaneseq
  %v599 = vshrl.u32 %v598, 7
  %v600 = vsub.s32 3, %v599
  %v601 = vrot.slane %v582, %v600
  %v602 = vlaneseq
  %v603 = vshrl.u32 %v602, 7
  %v604 = vsub.s32 4, %v603
  %v605 = vrot.slane %v582, %v604
  %v606 = vlaneseq
  %v607 = vshrl.u32 %v606, 7
  %v608 = vsub.s32 5, %v607
  %v609 = vrot.slane %v582, %v608
  %v610 = vlaneseq
  %v611 = vshrl.u32 %v610, 7
  %v612 = vsub.s32 6, %v611
  %v613 = vrot.slane %v582, %v612
  %v614 = vlaneseq
  %v615 = vshrl.u32 %v614, 7
  %v616 = vsub.s32 7, %v615
  %v617 = vrot.slane %v582, %v616
  %v618 = vlaneseq
  %v619 = vshrl.u32 %v618, 7
  %v620 = vsub.s32 0, %v619
  %v621 = vrot.slane %v583, %v620
  %v622 = vlaneseq
  %v623 = vshrl.u32 %v622, 7
  %v624 = vsub.s32 1, %v623
  %v625 = vrot.slane %v583, %v624
  %v626 = vlaneseq
  %v627 = vshrl.u32 %v626, 7
  %v628 = vsub.s32 2, %v627
  %v629 = vrot.slane %v583, %v628
  %v630 = vlaneseq
  %v631 = vshrl.u32 %v630, 7
  %v632 = vsub.s32 3, %v631
  %v633 = vrot.slane %v583, %v632
  %v646 = vmul.f32 %v570, %v589
  %v647 = vmul.f32 %v571, %v593
  %v648 = vmul.f32 %v572, %v597
  %v649 = vmul.f32 %v573, %v601
  %v650 = vmul.f32 %v574, %v605
  %v651 = vmul.f32 %v575, %v609
  %v652 = vmul.f32 %v576, %v613
  %v653 = vmul.f32 %v577, %v617
  %v654 = vmul.f32 %v578, %v621
  %v655 = vmul.f32 %v579, %v625
  %v656 = vmul.f32 %v580, %v629
  %v657 = vmul.f32 %v581, %v633
  %v658 = vld [vmem:[%s2] sm:$0xff]
  %v659 = vld [vmem:[%s2 + $0x8] sm:$0xf]
  %v660 = vmul.f32 %v510, %v646
  %v661 = vmul.f32 %v511, %v647
  %v662 = vmul.f32 %v512, %v648
  %v663 = vmul.f32 %v513, %v649
  %v664 = vmul.f32 %v514, %v650
  %v665 = vmul.f32 %v515, %v651
  %v666 = vmul.f32 %v516, %v652
  %v667 = vmul.f32 %v517, %v653
  %v668 = vmul.f32 %v518, %v654
  %v669 = vmul.f32 %v519, %v655
  %v670 = vmul.f32 %v520, %v656
  %v671 = vmul.f32 %v521, %v657
  %v684 = vcombine.low %v660, %v661
  %v685 = vcombine.low %v662, %v663
  %v686 = vcombine.low %v664, %v665
  %v687 = vcombine.low %v666, %v667
  %v689 = vunpack.c.l.s4 1966171168
  %v690 = vunpack.c.0.s8 %v689
  %v691 = vlaneseq
  %v692 = vshrl.u32 %v691, 7
  %v693 = vsub.s32 %v690, %v692
  %v694 = vrot.slane %v684, %v693
  %v696 = vunpack.c.l.s4 1966171168
  %v697 = vunpack.c.0.s8 %v696
  %v698 = vlaneseq
  %v699 = vshrl.u32 %v698, 7
  %v700 = vsub.s32 %v697, %v699
  %v701 = vrot.slane %v685, %v700
  %v703 = vunpack.c.l.s4 1966171168
  %v704 = vunpack.c.0.s8 %v703
  %v705 = vlaneseq
  %v706 = vshrl.u32 %v705, 7
  %v707 = vsub.s32 %v704, %v706
  %v708 = vrot.slane %v686, %v707
  %v710 = vunpack.c.l.s4 1966171168
  %v711 = vunpack.c.0.s8 %v710
  %v712 = vlaneseq
  %v713 = vshrl.u32 %v712, 7
  %v714 = vsub.s32 %v711, %v713
  %v715 = vrot.slane %v687, %v714
  %v716 = vcombine.low %v694, %v701
  %v717 = vcombine.low %v708, %v715
  %v719 = vunpack.c.l.s4 1966171168
  %v720 = vunpack.c.0.s8 %v719
  %v721 = vlaneseq
  %v722 = vshrl.u32 %v721, 7
  %v723 = vsub.s32 %v720, %v722
  %v724 = vrot.slane %v716, %v723
  %v726 = vunpack.c.l.s4 1966171168
  %v727 = vunpack.c.0.s8 %v726
  %v728 = vlaneseq
  %v729 = vshrl.u32 %v728, 7
  %v730 = vsub.s32 %v727, %v729
  %v731 = vrot.slane %v717, %v730
  %v732 = vcombine.low %v724, %v731
  %v733 = vcombine.low %v668, %v669
  %v734 = vcombine.low %v670, %v671
  %v736 = vunpack.c.l.s4 1966171168
  %v737 = vunpack.c.0.s8 %v736
  %v738 = vlaneseq
  %v739 = vshrl.u32 %v738, 7
  %v740 = vsub.s32 %v737, %v739
  %v741 = vrot.slane %v733, %v740
  %v743 = vunpack.c.l.s4 1966171168
  %v744 = vunpack.c.0.s8 %v743
  %v745 = vlaneseq
  %v746 = vshrl.u32 %v745, 7
  %v747 = vsub.s32 %v744, %v746
  %v748 = vrot.slane %v734, %v747
  %v749 = vcombine.low %v741, %v748
  %v751 = vunpack.c.l.s4 1966171168
  %v752 = vunpack.c.0.s8 %v751
  %v753 = vlaneseq
  %v754 = vshrl.u32 %v753, 7
  %v755 = vsub.s32 %v752, %v754
  %v756 = vrot.slane %v749, %v755
  %v759 = vsub.f32 %v658, %v732
  %v760 = vsub.f32 %v659, %v756
  %v761 = vlaneseq
  %v762 = vshrl.u32 %v761, 7
  %v763 = vsub.s32 0, %v762
  %v764 = vrot.slane %v646, %v763
  %v765 = vlaneseq
  %v766 = vshrl.u32 %v765, 7
  %v767 = vsub.s32 0, %v766
  %v768 = vrot.slane %v647, %v767
  %v769 = vlaneseq
  %v770 = vshrl.u32 %v769, 7
  %v771 = vsub.s32 0, %v770
  %v772 = vrot.slane %v648, %v771
  %v773 = vlaneseq
  %v774 = vshrl.u32 %v773, 7
  %v775 = vsub.s32 0, %v774
  %v776 = vrot.slane %v649, %v775
  %v777 = vlaneseq
  %v778 = vshrl.u32 %v777, 7
  %v779 = vsub.s32 0, %v778
  %v780 = vrot.slane %v650, %v779
  %v781 = vlaneseq
  %v782 = vshrl.u32 %v781, 7
  %v783 = vsub.s32 0, %v782
  %v784 = vrot.slane %v651, %v783
  %v785 = vlaneseq
  %v786 = vshrl.u32 %v785, 7
  %v787 = vsub.s32 0, %v786
  %v788 = vrot.slane %v652, %v787
  %v789 = vlaneseq
  %v790 = vshrl.u32 %v789, 7
  %v791 = vsub.s32 0, %v790
  %v792 = vrot.slane %v653, %v791
  %v793 = vlaneseq
  %v794 = vshrl.u32 %v793, 7
  %v795 = vsub.s32 0, %v794
  %v796 = vrot.slane %v654, %v795
  %v797 = vlaneseq
  %v798 = vshrl.u32 %v797, 7
  %v799 = vsub.s32 0, %v798
  %v800 = vrot.slane %v655, %v799
  %v801 = vlaneseq
  %v802 = vshrl.u32 %v801, 7
  %v803 = vsub.s32 0, %v802
  %v804 = vrot.slane %v656, %v803
  %v805 = vlaneseq
  %v806 = vshrl.u32 %v805, 7
  %v807 = vsub.s32 0, %v806
  %v808 = vrot.slane %v657, %v807
  %v809 = vmul.f32 %v29, %v764
  %v810 = vmul.f32 %v30, %v768
  %v811 = vmul.f32 %v31, %v772
  %v812 = vmul.f32 %v32, %v776
  %v813 = vmul.f32 %v33, %v780
  %v814 = vmul.f32 %v34, %v784
  %v815 = vmul.f32 %v35, %v788
  %v816 = vmul.f32 %v36, %v792
  %v817 = vmul.f32 %v37, %v796
  %v818 = vmul.f32 %v38, %v800
  %v819 = vmul.f32 %v39, %v804
  %v820 = vmul.f32 %v40, %v808
  %v821 = vmul.f32 %v41, %v764
  %v822 = vmul.f32 %v42, %v768
  %v823 = vmul.f32 %v43, %v772
  %v824 = vmul.f32 %v44, %v776
  %v825 = vmul.f32 %v45, %v780
  %v826 = vmul.f32 %v46, %v784
  %v827 = vmul.f32 %v47, %v788
  %v828 = vmul.f32 %v48, %v792
  %v829 = vmul.f32 %v49, %v796
  %v830 = vmul.f32 %v50, %v800
  %v831 = vmul.f32 %v51, %v804
  %v832 = vmul.f32 %v52, %v808
  %v833 = vmul.f32 %v53, %v764
  %v834 = vmul.f32 %v54, %v768
  %v835 = vmul.f32 %v55, %v772
  %v836 = vmul.f32 %v56, %v776
  %v837 = vmul.f32 %v57, %v780
  %v838 = vmul.f32 %v58, %v784
  %v839 = vmul.f32 %v59, %v788
  %v840 = vmul.f32 %v60, %v792
  %v841 = vmul.f32 %v61, %v796
  %v842 = vmul.f32 %v62, %v800
  %v843 = vmul.f32 %v63, %v804
  %v844 = vmul.f32 %v64, %v808
  %v845 = vmul.f32 %v65, %v764
  %v846 = vmul.f32 %v66, %v768
  %v847 = vmul.f32 %v67, %v772
  %v848 = vmul.f32 %v68, %v776
  %v849 = vmul.f32 %v69, %v780
  %v850 = vmul.f32 %v70, %v784
  %v851 = vmul.f32 %v71, %v788
  %v852 = vmul.f32 %v72, %v792
  %v853 = vmul.f32 %v73, %v796
  %v854 = vmul.f32 %v74, %v800
  %v855 = vmul.f32 %v75, %v804
  %v856 = vmul.f32 %v76, %v808
  %v857 = vmul.f32 %v77, %v764
  %v858 = vmul.f32 %v78, %v768
  %v859 = vmul.f32 %v79, %v772
  %v860 = vmul.f32 %v80, %v776
  %v861 = vmul.f32 %v81, %v780
  %v862 = vmul.f32 %v82, %v784
  %v863 = vmul.f32 %v83, %v788
  %v864 = vmul.f32 %v84, %v792
  %v865 = vmul.f32 %v85, %v796
  %v866 = vmul.f32 %v86, %v800
  %v867 = vmul.f32 %v87, %v804
  %v868 = vmul.f32 %v88, %v808
  %v869 = vmul.f32 %v89, %v764
  %v870 = vmul.f32 %v90, %v768
  %v871 = vmul.f32 %v91, %v772
  %v872 = vmul.f32 %v92, %v776
  %v873 = vmul.f32 %v93, %v780
  %v874 = vmul.f32 %v94, %v784
  %v875 = vmul.f32 %v95, %v788
  %v876 = vmul.f32 %v96, %v792
  %v877 = vmul.f32 %v97, %v796
  %v878 = vmul.f32 %v98, %v800
  %v879 = vmul.f32 %v99, %v804
  %v880 = vmul.f32 %v100, %v808
  %v881 = vmul.f32 %v101, %v764
  %v882 = vmul.f32 %v102, %v768
  %v883 = vmul.f32 %v103, %v772
  %v884 = vmul.f32 %v104, %v776
  %v885 = vmul.f32 %v105, %v780
  %v886 = vmul.f32 %v106, %v784
  %v887 = vmul.f32 %v107, %v788
  %v888 = vmul.f32 %v108, %v792
  %v889 = vmul.f32 %v109, %v796
  %v890 = vmul.f32 %v110, %v800
  %v891 = vmul.f32 %v111, %v804
  %v892 = vmul.f32 %v112, %v808
  %v895 = vlaneseq
  %v896 = vshrl.u32 %v895, 7
  %v897 = vsub.s32 0, %v896
  %v898 = vrot.slane %v759, %v897
  %v899 = vlaneseq
  %v900 = vshrl.u32 %v899, 7
  %v901 = vsub.s32 1, %v900
  %v902 = vrot.slane %v759, %v901
  %v903 = vlaneseq
  %v904 = vshrl.u32 %v903, 7
  %v905 = vsub.s32 2, %v904
  %v906 = vrot.slane %v759, %v905
  %v907 = vlaneseq
  %v908 = vshrl.u32 %v907, 7
  %v909 = vsub.s32 3, %v908
  %v910 = vrot.slane %v759, %v909
  %v911 = vlaneseq
  %v912 = vshrl.u32 %v911, 7
  %v913 = vsub.s32 4, %v912
  %v914 = vrot.slane %v759, %v913
  %v915 = vlaneseq
  %v916 = vshrl.u32 %v915, 7
  %v917 = vsub.s32 5, %v916
  %v918 = vrot.slane %v759, %v917
  %v919 = vlaneseq
  %v920 = vshrl.u32 %v919, 7
  %v921 = vsub.s32 6, %v920
  %v922 = vrot.slane %v759, %v921
  %v923 = vlaneseq
  %v924 = vshrl.u32 %v923, 7
  %v925 = vsub.s32 7, %v924
  %v926 = vrot.slane %v759, %v925
  %v927 = vlaneseq
  %v928 = vshrl.u32 %v927, 7
  %v929 = vsub.s32 0, %v928
  %v930 = vrot.slane %v760, %v929
  %v931 = vlaneseq
  %v932 = vshrl.u32 %v931, 7
  %v933 = vsub.s32 1, %v932
  %v934 = vrot.slane %v760, %v933
  %v935 = vlaneseq
  %v936 = vshrl.u32 %v935, 7
  %v937 = vsub.s32 2, %v936
  %v938 = vrot.slane %v760, %v937
  %v939 = vlaneseq
  %v940 = vshrl.u32 %v939, 7
  %v941 = vsub.s32 3, %v940
  %v942 = vrot.slane %v760, %v941
  %v955 = vadd.f32 %v809, %v898
  %v956 = vadd.f32 %v810, %v902
  %v957 = vadd.f32 %v811, %v906
  %v958 = vadd.f32 %v812, %v910
  %v959 = vadd.f32 %v813, %v914
  %v960 = vadd.f32 %v814, %v918
  %v961 = vadd.f32 %v815, %v922
  %v962 = vadd.f32 %v816, %v926
  %v963 = vadd.f32 %v817, %v930
  %v964 = vadd.f32 %v818, %v934
  %v965 = vadd.f32 %v819, %v938
  %v966 = vadd.f32 %v820, %v942
  %v967 = vadd.f32 %v821, %v898
  %v968 = vadd.f32 %v822, %v902
  %v969 = vadd.f32 %v823, %v906
  %v970 = vadd.f32 %v824, %v910
  %v971 = vadd.f32 %v825, %v914
  %v972 = vadd.f32 %v826, %v918
  %v973 = vadd.f32 %v827, %v922
  %v974 = vadd.f32 %v828, %v926
  %v975 = vadd.f32 %v829, %v930
  %v976 = vadd.f32 %v830, %v934
  %v977 = vadd.f32 %v831, %v938
  %v978 = vadd.f32 %v832, %v942
  %v979 = vadd.f32 %v833, %v898
  %v980 = vadd.f32 %v834, %v902
  %v981 = vadd.f32 %v835, %v906
  %v982 = vadd.f32 %v836, %v910
  %v983 = vadd.f32 %v837, %v914
  %v984 = vadd.f32 %v838, %v918
  %v985 = vadd.f32 %v839, %v922
  %v986 = vadd.f32 %v840, %v926
  %v987 = vadd.f32 %v841, %v930
  %v988 = vadd.f32 %v842, %v934
  %v989 = vadd.f32 %v843, %v938
  %v990 = vadd.f32 %v844, %v942
  %v991 = vadd.f32 %v845, %v898
  %v992 = vadd.f32 %v846, %v902
  %v993 = vadd.f32 %v847, %v906
  %v994 = vadd.f32 %v848, %v910
  %v995 = vadd.f32 %v849, %v914
  %v996 = vadd.f32 %v850, %v918
  %v997 = vadd.f32 %v851, %v922
  %v998 = vadd.f32 %v852, %v926
  %v999 = vadd.f32 %v853, %v930
  %v1000 = vadd.f32 %v854, %v934
  %v1001 = vadd.f32 %v855, %v938
  %v1002 = vadd.f32 %v856, %v942
  %v1003 = vadd.f32 %v857, %v898
  %v1004 = vadd.f32 %v858, %v902
  %v1005 = vadd.f32 %v859, %v906
  %v1006 = vadd.f32 %v860, %v910
  %v1007 = vadd.f32 %v861, %v914
  %v1008 = vadd.f32 %v862, %v918
  %v1009 = vadd.f32 %v863, %v922
  %v1010 = vadd.f32 %v864, %v926
  %v1011 = vadd.f32 %v865, %v930
  %v1012 = vadd.f32 %v866, %v934
  %v1013 = vadd.f32 %v867, %v938
  %v1014 = vadd.f32 %v868, %v942
  %v1015 = vadd.f32 %v869, %v898
  %v1016 = vadd.f32 %v870, %v902
  %v1017 = vadd.f32 %v871, %v906
  %v1018 = vadd.f32 %v872, %v910
  %v1019 = vadd.f32 %v873, %v914
  %v1020 = vadd.f32 %v874, %v918
  %v1021 = vadd.f32 %v875, %v922
  %v1022 = vadd.f32 %v876, %v926
  %v1023 = vadd.f32 %v877, %v930
  %v1024 = vadd.f32 %v878, %v934
  %v1025 = vadd.f32 %v879, %v938
  %v1026 = vadd.f32 %v880, %v942
  %v1027 = vadd.f32 %v881, %v898
  %v1028 = vadd.f32 %v882, %v902
  %v1029 = vadd.f32 %v883, %v906
  %v1030 = vadd.f32 %v884, %v910
  %v1031 = vadd.f32 %v885, %v914
  %v1032 = vadd.f32 %v886, %v918
  %v1033 = vadd.f32 %v887, %v922
  %v1034 = vadd.f32 %v888, %v926
  %v1035 = vadd.f32 %v889, %v930
  %v1036 = vadd.f32 %v890, %v934
  %v1037 = vadd.f32 %v891, %v938
  %v1038 = vadd.f32 %v892, %v942
  %v1039 = vmax.f32 %v955, 0.0
  %v1040 = vmax.f32 %v956, 0.0
  %v1041 = vmax.f32 %v957, 0.0
  %v1042 = vmax.f32 %v958, 0.0
  %v1043 = vmax.f32 %v959, 0.0
  %v1044 = vmax.f32 %v960, 0.0
  %v1045 = vmax.f32 %v961, 0.0
  %v1046 = vmax.f32 %v962, 0.0
  %v1047 = vmax.f32 %v963, 0.0
  %v1048 = vmax.f32 %v964, 0.0
  %v1049 = vmax.f32 %v965, 0.0
  %v1050 = vmax.f32 %v966, 0.0
  %v1051 = vmax.f32 %v967, 0.0
  %v1052 = vmax.f32 %v968, 0.0
  %v1053 = vmax.f32 %v969, 0.0
  %v1054 = vmax.f32 %v970, 0.0
  %v1055 = vmax.f32 %v971, 0.0
  %v1056 = vmax.f32 %v972, 0.0
  %v1057 = vmax.f32 %v973, 0.0
  %v1058 = vmax.f32 %v974, 0.0
  %v1059 = vmax.f32 %v975, 0.0
  %v1060 = vmax.f32 %v976, 0.0
  %v1061 = vmax.f32 %v977, 0.0
  %v1062 = vmax.f32 %v978, 0.0
  %v1063 = vmax.f32 %v979, 0.0
  %v1064 = vmax.f32 %v980, 0.0
  %v1065 = vmax.f32 %v981, 0.0
  %v1066 = vmax.f32 %v982, 0.0
  %v1067 = vmax.f32 %v983, 0.0
  %v1068 = vmax.f32 %v984, 0.0
  %v1069 = vmax.f32 %v985, 0.0
  %v1070 = vmax.f32 %v986, 0.0
  %v1071 = vmax.f32 %v987, 0.0
  %v1072 = vmax.f32 %v988, 0.0
  %v1073 = vmax.f32 %v989, 0.0
  %v1074 = vmax.f32 %v990, 0.0
  %v1075 = vmax.f32 %v991, 0.0
  %v1076 = vmax.f32 %v992, 0.0
  %v1077 = vmax.f32 %v993, 0.0
  %v1078 = vmax.f32 %v994, 0.0
  %v1079 = vmax.f32 %v995, 0.0
  %v1080 = vmax.f32 %v996, 0.0
  %v1081 = vmax.f32 %v997, 0.0
  %v1082 = vmax.f32 %v998, 0.0
  %v1083 = vmax.f32 %v999, 0.0
  %v1084 = vmax.f32 %v1000, 0.0
  %v1085 = vmax.f32 %v1001, 0.0
  %v1086 = vmax.f32 %v1002, 0.0
  %v1087 = vmax.f32 %v1003, 0.0
  %v1088 = vmax.f32 %v1004, 0.0
  %v1089 = vmax.f32 %v1005, 0.0
  %v1090 = vmax.f32 %v1006, 0.0
  %v1091 = vmax.f32 %v1007, 0.0
  %v1092 = vmax.f32 %v1008, 0.0
  %v1093 = vmax.f32 %v1009, 0.0
  %v1094 = vmax.f32 %v1010, 0.0
  %v1095 = vmax.f32 %v1011, 0.0
  %v1096 = vmax.f32 %v1012, 0.0
  %v1097 = vmax.f32 %v1013, 0.0
  %v1098 = vmax.f32 %v1014, 0.0
  %v1099 = vmax.f32 %v1015, 0.0
  %v1100 = vmax.f32 %v1016, 0.0
  %v1101 = vmax.f32 %v1017, 0.0
  %v1102 = vmax.f32 %v1018, 0.0
  %v1103 = vmax.f32 %v1019, 0.0
  %v1104 = vmax.f32 %v1020, 0.0
  %v1105 = vmax.f32 %v1021, 0.0
  %v1106 = vmax.f32 %v1022, 0.0
  %v1107 = vmax.f32 %v1023, 0.0
  %v1108 = vmax.f32 %v1024, 0.0
  %v1109 = vmax.f32 %v1025, 0.0
  %v1110 = vmax.f32 %v1026, 0.0
  %v1111 = vmax.f32 %v1027, 0.0
  %v1112 = vmax.f32 %v1028, 0.0
  %v1113 = vmax.f32 %v1029, 0.0
  %v1114 = vmax.f32 %v1030, 0.0
  %v1115 = vmax.f32 %v1031, 0.0
  %v1116 = vmax.f32 %v1032, 0.0
  %v1117 = vmax.f32 %v1033, 0.0
  %v1118 = vmax.f32 %v1034, 0.0
  %v1119 = vmax.f32 %v1035, 0.0
  %v1120 = vmax.f32 %v1036, 0.0
  %v1121 = vmax.f32 %v1037, 0.0
  %v1122 = vmax.f32 %v1038, 0.0
  %v1123 = vld [vmem:[%s3] sm:$0xff]
  %v1124 = vld [vmem:[%s3 + $0x8] sm:$0xff]
  %v1125 = vld [vmem:[%s3 + $0x10] sm:$0xff]
  %v1126 = vld [vmem:[%s3 + $0x18] sm:$0xff]
  %v1127 = vld [vmem:[%s3 + $0x20] sm:$0xff]
  %v1128 = vld [vmem:[%s3 + $0x28] sm:$0xff]
  %v1129 = vld [vmem:[%s3 + $0x30] sm:$0xff]
  %v1130 = vld [vmem:[%s3 + $0x38] sm:$0xff]
  %v1131 = vld [vmem:[%s3 + $0x40] sm:$0xff]
  %v1132 = vld [vmem:[%s3 + $0x48] sm:$0xff]
  %v1133 = vld [vmem:[%s3 + $0x50] sm:$0xff]
  %v1134 = vld [vmem:[%s3 + $0x58] sm:$0xff]
  %v1135 = vld [vmem:[%s3 + $0x60] sm:$0xff]
  %v1136 = vld [vmem:[%s3 + $0x68] sm:$0xff]
  %v1137 = vld [vmem:[%s3 + $0x70] sm:$0xff]
  %v1138 = vld [vmem:[%s3 + $0x78] sm:$0xff]
  %v1139 = vld [vmem:[%s3 + $0x80] sm:$0xff]
  %v1140 = vld [vmem:[%s3 + $0x88] sm:$0xff]
  %v1141 = vld [vmem:[%s3 + $0x90] sm:$0xff]
  %v1142 = vld [vmem:[%s3 + $0x98] sm:$0xff]
  %v1143 = vld [vmem:[%s3 + $0xa0] sm:$0xff]
  %v1144 = vld [vmem:[%s3 + $0xa8] sm:$0xff]
  %v1145 = vld [vmem:[%s3 + $0xb0] sm:$0xff]
  %v1146 = vld [vmem:[%s3 + $0xb8] sm:$0xff]
  %v1147 = vld [vmem:[%s3 + $0xc0] sm:$0xff]
  %v1148 = vld [vmem:[%s3 + $0xc8] sm:$0xff]
  %v1149 = vld [vmem:[%s3 + $0xd0] sm:$0xff]
  %v1150 = vld [vmem:[%s3 + $0xd8] sm:$0xff]
  %v1151 = vld [vmem:[%s3 + $0xe0] sm:$0xff]
  %v1152 = vld [vmem:[%s3 + $0xe8] sm:$0xff]
  %v1153 = vld [vmem:[%s3 + $0xf0] sm:$0xff]
  %v1154 = vld [vmem:[%s3 + $0xf8] sm:$0xff]
  %v1155 = vld [vmem:[%s3 + $0x100] sm:$0xff]
  %v1156 = vld [vmem:[%s3 + $0x108] sm:$0xff]
  %v1157 = vld [vmem:[%s3 + $0x110] sm:$0xff]
  %v1158 = vld [vmem:[%s3 + $0x118] sm:$0xff]
  %v1159 = vld [vmem:[%s3 + $0x120] sm:$0xff]
  %v1160 = vld [vmem:[%s3 + $0x128] sm:$0xff]
  %v1161 = vld [vmem:[%s3 + $0x130] sm:$0xff]
  %v1162 = vld [vmem:[%s3 + $0x138] sm:$0xff]
  %v1163 = vld [vmem:[%s3 + $0x140] sm:$0xff]
  %v1164 = vld [vmem:[%s3 + $0x148] sm:$0xff]
  %v1165 = vld [vmem:[%s3 + $0x150] sm:$0xff]
  %v1166 = vld [vmem:[%s3 + $0x158] sm:$0xff]
  %v1167 = vld [vmem:[%s3 + $0x160] sm:$0xff]
  %v1168 = vld [vmem:[%s3 + $0x168] sm:$0xff]
  %v1169 = vld [vmem:[%s3 + $0x170] sm:$0xff]
  %v1170 = vld [vmem:[%s3 + $0x178] sm:$0xff]
  %v1171 = vld [vmem:[%s3 + $0x180] sm:$0xff]
  %v1172 = vld [vmem:[%s3 + $0x188] sm:$0xff]
  %v1173 = vld [vmem:[%s3 + $0x190] sm:$0xff]
  %v1174 = vld [vmem:[%s3 + $0x198] sm:$0xff]
  %v1175 = vld [vmem:[%s3 + $0x1a0] sm:$0xff]
  %v1176 = vld [vmem:[%s3 + $0x1a8] sm:$0xff]
  %v1177 = vld [vmem:[%s3 + $0x1b0] sm:$0xff]
  %v1178 = vld [vmem:[%s3 + $0x1b8] sm:$0xff]
  %v1179 = vld [vmem:[%s3 + $0x1c0] sm:$0xff]
  %v1180 = vld [vmem:[%s3 + $0x1c8] sm:$0xff]
  %v1181 = vld [vmem:[%s3 + $0x1d0] sm:$0xff]
  %v1182 = vld [vmem:[%s3 + $0x1d8] sm:$0xff]
  %v1183 = vld [vmem:[%s3 + $0x1e0] sm:$0xff]
  %v1184 = vld [vmem:[%s3 + $0x1e8] sm:$0xff]
  %v1185 = vld [vmem:[%s3 + $0x1f0] sm:$0xff]
  %v1186 = vld [vmem:[%s3 + $0x1f8] sm:$0xff]
  %v1187 = vld [vmem:[%s3 + $0x200] sm:$0xff]
  %v1188 = vld [vmem:[%s3 + $0x208] sm:$0xff]
  %v1189 = vld [vmem:[%s3 + $0x210] sm:$0xff]
  %v1190 = vld [vmem:[%s3 + $0x218] sm:$0xff]
  %v1191 = vld [vmem:[%s3 + $0x220] sm:$0xff]
  %v1192 = vld [vmem:[%s3 + $0x228] sm:$0xff]
  %v1193 = vld [vmem:[%s3 + $0x230] sm:$0xff]
  %v1194 = vld [vmem:[%s3 + $0x238] sm:$0xff]
  %v1195 = vld [vmem:[%s3 + $0x240] sm:$0xff]
  %v1196 = vld [vmem:[%s3 + $0x248] sm:$0xff]
  %v1197 = vld [vmem:[%s3 + $0x250] sm:$0xff]
  %v1198 = vld [vmem:[%s3 + $0x258] sm:$0xff]
  %v1199 = vld [vmem:[%s3 + $0x260] sm:$0xff]
  %v1200 = vld [vmem:[%s3 + $0x268] sm:$0xff]
  %v1201 = vld [vmem:[%s3 + $0x270] sm:$0xff]
  %v1202 = vld [vmem:[%s3 + $0x278] sm:$0xff]
  %v1203 = vld [vmem:[%s3 + $0x280] sm:$0xff]
  %v1204 = vld [vmem:[%s3 + $0x288] sm:$0xff]
  %v1205 = vld [vmem:[%s3 + $0x290] sm:$0xff]
  %v1206 = vld [vmem:[%s3 + $0x298] sm:$0xff]
  %v1207 = vld [vmem:[%s3 + $0x2a0] sm:$0xff]
  %v1208 = vld [vmem:[%s3 + $0x2a8] sm:$0xff]
  %v1209 = vld [vmem:[%s3 + $0x2b0] sm:$0xff]
  %v1210 = vld [vmem:[%s3 + $0x2b8] sm:$0xff]
  %v1211 = vld [vmem:[%s3 + $0x2c0] sm:$0xff]
  %v1212 = vld [vmem:[%s3 + $0x2c8] sm:$0xff]
  %v1213 = vld [vmem:[%s3 + $0x2d0] sm:$0xff]
  %v1214 = vld [vmem:[%s3 + $0x2d8] sm:$0xff]
  %v1215 = vld [vmem:[%s3 + $0x2e0] sm:$0xff]
  %v1216 = vld [vmem:[%s3 + $0x2e8] sm:$0xff]
  %v1217 = vld [vmem:[%s3 + $0x2f0] sm:$0xff]
  %v1218 = vld [vmem:[%s3 + $0x2f8] sm:$0xff]
  %v1219 = vld [vmem:[%s3 + $0x300] sm:$0xff]
  %v1220 = vld [vmem:[%s3 + $0x308] sm:$0xff]
  %v1221 = vld [vmem:[%s3 + $0x310] sm:$0xff]
  %v1222 = vld [vmem:[%s3 + $0x318] sm:$0xff]
  %v1223 = vld [vmem:[%s3 + $0x320] sm:$0xff]
  %v1224 = vld [vmem:[%s3 + $0x328] sm:$0xff]
  %v1225 = vld [vmem:[%s3 + $0x330] sm:$0xff]
  %v1226 = vld [vmem:[%s3 + $0x338] sm:$0xff]
  %v1227 = vld [vmem:[%s3 + $0x340] sm:$0xff]
  %v1228 = vld [vmem:[%s3 + $0x348] sm:$0xff]
  %v1229 = vld [vmem:[%s3 + $0x350] sm:$0xff]
  %v1230 = vld [vmem:[%s3 + $0x358] sm:$0xff]
  %v1231 = vld [vmem:[%s3 + $0x360] sm:$0xff]
  %v1232 = vld [vmem:[%s3 + $0x368] sm:$0xff]
  %v1233 = vld [vmem:[%s3 + $0x370] sm:$0xff]
  %v1234 = vld [vmem:[%s3 + $0x378] sm:$0xff]
  %v1235 = vld [vmem:[%s3 + $0x380] sm:$0xff]
  %v1236 = vld [vmem:[%s3 + $0x388] sm:$0xff]
  %v1237 = vld [vmem:[%s3 + $0x390] sm:$0xff]
  %v1238 = vld [vmem:[%s3 + $0x398] sm:$0xff]
  %v1239 = vld [vmem:[%s3 + $0x3a0] sm:$0xff]
  %v1240 = vld [vmem:[%s3 + $0x3a8] sm:$0xff]
  %v1241 = vld [vmem:[%s3 + $0x3b0] sm:$0xff]
  %v1242 = vld [vmem:[%s3 + $0x3b8] sm:$0xff]
  %v1243 = vld [vmem:[%s3 + $0x3c0] sm:$0xff]
  %v1244 = vld [vmem:[%s3 + $0x3c8] sm:$0xff]
  %v1245 = vld [vmem:[%s3 + $0x3d0] sm:$0xff]
  %v1246 = vld [vmem:[%s3 + $0x3d8] sm:$0xff]
  %v1247 = vld [vmem:[%s3 + $0x3e0] sm:$0xff]
  %v1248 = vld [vmem:[%s3 + $0x3e8] sm:$0xff]
  %v1249 = vld [vmem:[%s3 + $0x3f0] sm:$0xff]
  %v1250 = vld [vmem:[%s3 + $0x3f8] sm:$0xff]
  %v1251 = vld [vmem:[%s3 + $0x400] sm:$0xff]
  %v1252 = vld [vmem:[%s3 + $0x408] sm:$0xff]
  %v1253 = vld [vmem:[%s3 + $0x410] sm:$0xff]
  %v1254 = vld [vmem:[%s3 + $0x418] sm:$0xff]
  %v1255 = vld [vmem:[%s3 + $0x420] sm:$0xff]
  %v1256 = vld [vmem:[%s3 + $0x428] sm:$0xff]
  %v1257 = vld [vmem:[%s3 + $0x430] sm:$0xff]
  %v1258 = vld [vmem:[%s3 + $0x438] sm:$0xff]
  %v1259 = vld [vmem:[%s3 + $0x440] sm:$0xff]
  %v1260 = vld [vmem:[%s3 + $0x448] sm:$0xff]
  %v1261 = vld [vmem:[%s3 + $0x450] sm:$0xff]
  %v1262 = vld [vmem:[%s3 + $0x458] sm:$0xff]
  %v1263 = vld [vmem:[%s3 + $0x460] sm:$0xff]
  %v1264 = vld [vmem:[%s3 + $0x468] sm:$0xff]
  %v1265 = vld [vmem:[%s3 + $0x470] sm:$0xff]
  %v1266 = vld [vmem:[%s3 + $0x478] sm:$0xff]
  %v1267 = vld [vmem:[%s3 + $0x480] sm:$0xff]
  %v1268 = vld [vmem:[%s3 + $0x488] sm:$0xff]
  %v1269 = vld [vmem:[%s3 + $0x490] sm:$0xff]
  %v1270 = vld [vmem:[%s3 + $0x498] sm:$0xff]
  %v1271 = vld [vmem:[%s3 + $0x4a0] sm:$0xff]
  %v1272 = vld [vmem:[%s3 + $0x4a8] sm:$0xff]
  %v1273 = vld [vmem:[%s3 + $0x4b0] sm:$0xff]
  %v1274 = vld [vmem:[%s3 + $0x4b8] sm:$0xff]
  %v1275 = vld [vmem:[%s3 + $0x4c0] sm:$0xff]
  %v1276 = vld [vmem:[%s3 + $0x4c8] sm:$0xff]
  %v1277 = vld [vmem:[%s3 + $0x4d0] sm:$0xff]
  %v1278 = vld [vmem:[%s3 + $0x4d8] sm:$0xff]
  %v1279 = vld [vmem:[%s3 + $0x4e0] sm:$0xff]
  %v1280 = vld [vmem:[%s3 + $0x4e8] sm:$0xff]
  %v1281 = vld [vmem:[%s3 + $0x4f0] sm:$0xff]
  %v1282 = vld [vmem:[%s3 + $0x4f8] sm:$0xff]
  %v1283 = vld [vmem:[%s3 + $0x500] sm:$0xff]
  %v1284 = vld [vmem:[%s3 + $0x508] sm:$0xff]
  %v1285 = vld [vmem:[%s3 + $0x510] sm:$0xff]
  %v1286 = vld [vmem:[%s3 + $0x518] sm:$0xff]
  %v1287 = vld [vmem:[%s3 + $0x520] sm:$0xff]
  %v1288 = vld [vmem:[%s3 + $0x528] sm:$0xff]
  %v1289 = vld [vmem:[%s3 + $0x530] sm:$0xff]
  %v1290 = vld [vmem:[%s3 + $0x538] sm:$0xff]
  %v1291 = vld [vmem:[%s3 + $0x540] sm:$0xff]
  %v1292 = vld [vmem:[%s3 + $0x548] sm:$0xff]
  %v1293 = vld [vmem:[%s3 + $0x550] sm:$0xff]
  %v1294 = vld [vmem:[%s3 + $0x558] sm:$0xff]
  %v1295 = vld [vmem:[%s3 + $0x560] sm:$0xff]
  %v1296 = vld [vmem:[%s3 + $0x568] sm:$0xff]
  %v1297 = vld [vmem:[%s3 + $0x570] sm:$0xff]
  %v1298 = vld [vmem:[%s3 + $0x578] sm:$0xff]
  %v1299 = vld [vmem:[%s3 + $0x580] sm:$0xff]
  %v1300 = vld [vmem:[%s3 + $0x588] sm:$0xff]
  %v1301 = vld [vmem:[%s3 + $0x590] sm:$0xff]
  %v1302 = vld [vmem:[%s3 + $0x598] sm:$0xff]
  %v1303 = vld [vmem:[%s3 + $0x5a0] sm:$0xff]
  %v1304 = vld [vmem:[%s3 + $0x5a8] sm:$0xff]
  %v1305 = vld [vmem:[%s3 + $0x5b0] sm:$0xff]
  %v1306 = vld [vmem:[%s3 + $0x5b8] sm:$0xff]
  %v1307 = vld [vmem:[%s3 + $0x5c0] sm:$0xff]
  %v1308 = vld [vmem:[%s3 + $0x5c8] sm:$0xff]
  %v1309 = vld [vmem:[%s3 + $0x5d0] sm:$0xff]
  %v1310 = vld [vmem:[%s3 + $0x5d8] sm:$0xff]
  %v1311 = vld [vmem:[%s3 + $0x5e0] sm:$0xff]
  %v1312 = vld [vmem:[%s3 + $0x5e8] sm:$0xff]
  %v1313 = vld [vmem:[%s3 + $0x5f0] sm:$0xff]
  %v1314 = vld [vmem:[%s3 + $0x5f8] sm:$0xff]
  %1315 = vmatprep.subr.mxu0 0.0
  %1316 = vmatpush1.msra.mxu0 %v1123
  %1317 = vmatprep.subr.mxu0 0.0
  %1318 = vmatpush1.msra.mxu0 %v1124
  %1319 = vmatprep.subr.mxu0 0.0
  %1320 = vmatpush1.msra.mxu0 %v1125
  %1321 = vmatprep.subr.mxu0 0.0
  %1322 = vmatpush1.msra.mxu0 %v1126
  %1323 = vmatprep.subr.mxu0 0.0
  %1324 = vmatpush1.msra.mxu0 %v1127
  %1325 = vmatprep.subr.mxu0 0.0
  %1326 = vmatpush1.msra.mxu0 %v1128
  %1327 = vmatprep.subr.mxu0 0.0
  %1328 = vmatpush1.msra.mxu0 %v1129
  %1329 = vmatprep.subr.mxu0 0.0
  %1330 = vmatpush1.msra.mxu0 %v1130
  %1331 = vmatprep.subr.mxu0 0.0
  %1332 = vmatpush1.msra.mxu0 %v1131
  %1333 = vmatprep.subr.mxu0 0.0
  %1334 = vmatpush1.msra.mxu0 %v1132
  %1335 = vmatprep.subr.mxu0 0.0
  %1336 = vmatpush1.msra.mxu0 %v1133
  %1337 = vmatprep.subr.mxu0 0.0
  %1338 = vmatpush1.msra.mxu0 %v1134
  %1339 = vmatprep.subr.mxu0 0.0
  %1340 = vmatpush1.msra.mxu0 %v1135
  %1341 = vmatprep.subr.mxu0 0.0
  %1342 = vmatpush1.msra.mxu0 %v1136
  %1343 = vmatprep.subr.mxu0 0.0
  %1344 = vmatpush1.msra.mxu0 %v1137
  %1345 = vmatprep.subr.mxu0 0.0
  %1346 = vmatpush1.msra.mxu0 %v1138
  %1347 = vmatprep.subr.mxu0 0.0
  %1348 = vmatpush1.msra.mxu0 %v1139
  %1349 = vmatprep.subr.mxu0 0.0
  %1350 = vmatpush1.msra.mxu0 %v1140
  %1351 = vmatprep.subr.mxu0 0.0
  %1352 = vmatpush1.msra.mxu0 %v1141
  %1353 = vmatprep.subr.mxu0 0.0
  %1354 = vmatpush1.msra.mxu0 %v1142
  %1355 = vmatprep.subr.mxu0 0.0
  %1356 = vmatpush1.msra.mxu0 %v1143
  %1357 = vmatprep.subr.mxu0 0.0
  %1358 = vmatpush1.msra.mxu0 %v1144
  %1359 = vmatprep.subr.mxu0 0.0
  %1360 = vmatpush1.msra.mxu0 %v1145
  %1361 = vmatprep.subr.mxu0 0.0
  %1362 = vmatpush1.msra.mxu0 %v1146
  %1363 = vmatprep.subr.mxu0 0.0
  %1364 = vmatpush1.msra.mxu0 %v1147
  %1365 = vmatprep.subr.mxu0 0.0
  %1366 = vmatpush1.msra.mxu0 %v1148
  %1367 = vmatprep.subr.mxu0 0.0
  %1368 = vmatpush1.msra.mxu0 %v1149
  %1369 = vmatprep.subr.mxu0 0.0
  %1370 = vmatpush1.msra.mxu0 %v1150
  %1371 = vmatprep.subr.mxu0 0.0
  %1372 = vmatpush1.msra.mxu0 %v1151
  %1373 = vmatprep.subr.mxu0 0.0
  %1374 = vmatpush1.msra.mxu0 %v1152
  %1375 = vmatprep.subr.mxu0 0.0
  %1376 = vmatpush1.msra.mxu0 %v1153
  %1377 = vmatprep.subr.mxu0 0.0
  %1378 = vmatpush1.msra.mxu0 %v1154
  %1379 = vmatprep.mubr.f32.mxu0 %v1040
  %1380 = vmatmul.mubr.f32.gmra.mrb[0].mxu0 %v1039
  %v1381 = vpop.f32.mrb[0].mxu0
  %v1382 = vadd.f32 0.0, %v1381
  %v1383 = vpop.f32.mrb[0].mxu0
  %1384 = vmatprep.mubr.f32.mxu0 %v1052
  %1385 = vmatmul.mubr.f32.gmra.mrb[0].mxu0 %v1051
  %v1386 = vpop.f32.mrb[0].mxu0
  %v1387 = vadd.f32 0.0, %v1386
  %v1388 = vpop.f32.mrb[0].mxu0
  %1389 = vmatprep.mubr.f32.mxu0 %v1064
  %1390 = vmatmul.mubr.f32.gmra.mrb[0].mxu0 %v1063
  %v1391 = vpop.f32.mrb[0].mxu0
  %v1392 = vadd.f32 0.0, %v1391
  %v1393 = vpop.f32.mrb[0].mxu0
  %1394 = vmatprep.mubr.f32.mxu0 %v1076
  %1395 = vmatmul.mubr.f32.gmra.mrb[0].mxu0 %v1075
  %v1396 = vpop.f32.mrb[0].mxu0
  %v1397 = vadd.f32 0.0, %v1396
  %v1398 = vpop.f32.mrb[0].mxu0
  %1399 = vmatprep.mubr.f32.mxu0 %v1088
  %1400 = vmatmul.mubr.f32.gmra.mrb[0].mxu0 %v1087
  %v1401 = vpop.f32.mrb[0].mxu0
  %v1402 = vadd.f32 0.0, %v1401
  %v1403 = vpop.f32.mrb[0].mxu0
  %1404 = vmatprep.mubr.f32.mxu0 %v1100
  %1405 = vmatmul.mubr.f32.gmra.mrb[0].mxu0 %v1099
  %v1406 = vpop.f32.mrb[0].mxu0
  %v1407 = vadd.f32 0.0, %v1406
  %v1408 = vpop.f32.mrb[0].mxu0
  %1409 = vmatprep.mubr.f32.mxu0 %v1112
  %1410 = vmatmul.mubr.f32.gmra.mrb[0].mxu0 %v1111
  %v1411 = vpop.f32.mrb[0].mxu0
  %v1412 = vadd.f32 0.0, %v1411
  %v1413 = vpop.f32.mrb[0].mxu0
  %1414 = vdwg.mxu0
  %1415 = vmatprep.subr.mxu0 0.0
  %1416 = vmatpush1.msra.mxu0 %v1155
  %1417 = vmatprep.subr.mxu0 0.0
  %1418 = vmatpush1.msra.mxu0 %v1156
  %1419 = vmatprep.subr.mxu0 0.0
  %1420 = vmatpush1.msra.mxu0 %v1157
  %1421 = vmatprep.subr.mxu0 0.0
  %1422 = vmatpush1.msra.mxu0 %v1158
  %1423 = vmatprep.subr.mxu0 0.0
  %1424 = vmatpush1.msra.mxu0 %v1159
  %1425 = vmatprep.subr.mxu0 0.0
  %1426 = vmatpush1.msra.mxu0 %v1160
  %1427 = vmatprep.subr.mxu0 0.0
  %1428 = vmatpush1.msra.mxu0 %v1161
  %1429 = vmatprep.subr.mxu0 0.0
  %1430 = vmatpush1.msra.mxu0 %v1162
  %1431 = vmatprep.subr.mxu0 0.0
  %1432 = vmatpush1.msra.mxu0 %v1163
  %1433 = vmatprep.subr.mxu0 0.0
  %1434 = vmatpush1.msra.mxu0 %v1164
  %1435 = vmatprep.subr.mxu0 0.0
  %1436 = vmatpush1.msra.mxu0 %v1165
  %1437 = vmatprep.subr.mxu0 0.0
  %1438 = vmatpush1.msra.mxu0 %v1166
  %1439 = vmatprep.subr.mxu0 0.0
  %1440 = vmatpush1.msra.mxu0 %v1167
  %1441 = vmatprep.subr.mxu0 0.0
  %1442 = vmatpush1.msra.mxu0 %v1168
  %1443 = vmatprep.subr.mxu0 0.0
  %1444 = vmatpush1.msra.mxu0 %v1169
  %1445 = vmatprep.subr.mxu0 0.0
  %1446 = vmatpush1.msra.mxu0 %v1170
  %1447 = vmatprep.subr.mxu0 0.0
  %1448 = vmatpush1.msra.mxu0 %v1171
  %1449 = vmatprep.subr.mxu0 0.0
  %1450 = vmatpush1.msra.mxu0 %v1172
  %1451 = vmatprep.subr.mxu0 0.0
  %1452 = vmatpush1.msra.mxu0 %v1173
  %1453 = vmatprep.subr.mxu0 0.0
  %1454 = vmatpush1.msra.mxu0 %v1174
  %1455 = vmatprep.subr.mxu0 0.0
  %1456 = vmatpush1.msra.mxu0 %v1175
  %1457 = vmatprep.subr.mxu0 0.0
  %1458 = vmatpush1.msra.mxu0 %v1176
  %1459 = vmatprep.subr.mxu0 0.0
  %1460 = vmatpush1.msra.mxu0 %v1177
  %1461 = vmatprep.subr.mxu0 0.0
  %1462 = vmatpush1.msra.mxu0 %v1178
  %1463 = vmatprep.subr.mxu0 0.0
  %1464 = vmatpush1.msra.mxu0 %v1179
  %1465 = vmatprep.subr.mxu0 0.0
  %1466 = vmatpush1.msra.mxu0 %v1180
  %1467 = vmatprep.subr.mxu0 0.0
  %1468 = vmatpush1.msra.mxu0 %v1181
  %1469 = vmatprep.subr.mxu0 0.0
  %1470 = vmatpush1.msra.mxu0 %v1182
  %1471 = vmatprep.subr.mxu0 0.0
  %1472 = vmatpush1.msra.mxu0 %v1183
  %1473 = vmatprep.subr.mxu0 0.0
  %1474 = vmatpush1.msra.mxu0 %v1184
  %1475 = vmatprep.subr.mxu0 0.0
  %1476 = vmatpush1.msra.mxu0 %v1185
  %1477 = vmatprep.subr.mxu0 0.0
  %1478 = vmatpush1.msra.mxu0 %v1186
  %1479 = vmatprep.mubr.f32.mxu0 %v1042
  %1480 = vmatmul.mubr.f32.gmra.mrb[0].mxu0 %v1041
  %v1481 = vpop.f32.mrb[0].mxu0
  %v1482 = vadd.f32 %v1382, %v1481
  %v1483 = vpop.f32.mrb[0].mxu0
  %1484 = vmatprep.mubr.f32.mxu0 %v1054
  %1485 = vmatmul.mubr.f32.gmra.mrb[0].mxu0 %v1053
  %v1486 = vpop.f32.mrb[0].mxu0
  %v1487 = vadd.f32 %v1387, %v1486
  %v1488 = vpop.f32.mrb[0].mxu0
  %1489 = vmatprep.mubr.f32.mxu0 %v1066
  %1490 = vmatmul.mubr.f32.gmra.mrb[0].mxu0 %v1065
  %v1491 = vpop.f32.mrb[0].mxu0
  %v1492 = vadd.f32 %v1392, %v1491
  %v1493 = vpop.f32.mrb[0].mxu0
  %1494 = vmatprep.mubr.f32.mxu0 %v1078
  %1495 = vmatmul.mubr.f32.gmra.mrb[0].mxu0 %v1077
  %v1496 = vpop.f32.mrb[0].mxu0
  %v1497 = vadd.f32 %v1397, %v1496
  %v1498 = vpop.f32.mrb[0].mxu0
  %1499 = vmatprep.mubr.f32.mxu0 %v1090
  %1500 = vmatmul.mubr.f32.gmra.mrb[0].mxu0 %v1089
  %v1501 = vpop.f32.mrb[0].mxu0
  %v1502 = vadd.f32 %v1402, %v1501
  %v1503 = vpop.f32.mrb[0].mxu0
  %1504 = vmatprep.mubr.f32.mxu0 %v1102
  %1505 = vmatmul.mubr.f32.gmra.mrb[0].mxu0 %v1101
  %v1506 = vpop.f32.mrb[0].mxu0
  %v1507 = vadd.f32 %v1407, %v1506
  %v1508 = vpop.f32.mrb[0].mxu0
  %1509 = vmatprep.mubr.f32.mxu0 %v1114
  %1510 = vmatmul.mubr.f32.gmra.mrb[0].mxu0 %v1113
  %v1511 = vpop.f32.mrb[0].mxu0
  %v1512 = vadd.f32 %v1412, %v1511
  %v1513 = vpop.f32.mrb[0].mxu0
  %1514 = vdwg.mxu0
  %1515 = vmatprep.subr.mxu0 0.0
  %1516 = vmatpush1.msra.mxu0 %v1187
  %1517 = vmatprep.subr.mxu0 0.0
  %1518 = vmatpush1.msra.mxu0 %v1188
  %1519 = vmatprep.subr.mxu0 0.0
  %1520 = vmatpush1.msra.mxu0 %v1189
  %1521 = vmatprep.subr.mxu0 0.0
  %1522 = vmatpush1.msra.mxu0 %v1190
  %1523 = vmatprep.subr.mxu0 0.0
  %1524 = vmatpush1.msra.mxu0 %v1191
  %1525 = vmatprep.subr.mxu0 0.0
  %1526 = vmatpush1.msra.mxu0 %v1192
  %1527 = vmatprep.subr.mxu0 0.0
  %1528 = vmatpush1.msra.mxu0 %v1193
  %1529 = vmatprep.subr.mxu0 0.0
  %1530 = vmatpush1.msra.mxu0 %v1194
  %1531 = vmatprep.subr.mxu0 0.0
  %1532 = vmatpush1.msra.mxu0 %v1195
  %1533 = vmatprep.subr.mxu0 0.0
  %1534 = vmatpush1.msra.mxu0 %v1196
  %1535 = vmatprep.subr.mxu0 0.0
  %1536 = vmatpush1.msra.mxu0 %v1197
  %1537 = vmatprep.subr.mxu0 0.0
  %1538 = vmatpush1.msra.mxu0 %v1198
  %1539 = vmatprep.subr.mxu0 0.0
  %1540 = vmatpush1.msra.mxu0 %v1199
  %1541 = vmatprep.subr.mxu0 0.0
  %1542 = vmatpush1.msra.mxu0 %v1200
  %1543 = vmatprep.subr.mxu0 0.0
  %1544 = vmatpush1.msra.mxu0 %v1201
  %1545 = vmatprep.subr.mxu0 0.0
  %1546 = vmatpush1.msra.mxu0 %v1202
  %1547 = vmatprep.subr.mxu0 0.0
  %1548 = vmatpush1.msra.mxu0 %v1203
  %1549 = vmatprep.subr.mxu0 0.0
  %1550 = vmatpush1.msra.mxu0 %v1204
  %1551 = vmatprep.subr.mxu0 0.0
  %1552 = vmatpush1.msra.mxu0 %v1205
  %1553 = vmatprep.subr.mxu0 0.0
  %1554 = vmatpush1.msra.mxu0 %v1206
  %1555 = vmatprep.subr.mxu0 0.0
  %1556 = vmatpush1.msra.mxu0 %v1207
  %1557 = vmatprep.subr.mxu0 0.0
  %1558 = vmatpush1.msra.mxu0 %v1208
  %1559 = vmatprep.subr.mxu0 0.0
  %1560 = vmatpush1.msra.mxu0 %v1209
  %1561 = vmatprep.subr.mxu0 0.0
  %1562 = vmatpush1.msra.mxu0 %v1210
  %1563 = vmatprep.subr.mxu0 0.0
  %1564 = vmatpush1.msra.mxu0 %v1211
  %1565 = vmatprep.subr.mxu0 0.0
  %1566 = vmatpush1.msra.mxu0 %v1212
  %1567 = vmatprep.subr.mxu0 0.0
  %1568 = vmatpush1.msra.mxu0 %v1213
  %1569 = vmatprep.subr.mxu0 0.0
  %1570 = vmatpush1.msra.mxu0 %v1214
  %1571 = vmatprep.subr.mxu0 0.0
  %1572 = vmatpush1.msra.mxu0 %v1215
  %1573 = vmatprep.subr.mxu0 0.0
  %1574 = vmatpush1.msra.mxu0 %v1216
  %1575 = vmatprep.subr.mxu0 0.0
  %1576 = vmatpush1.msra.mxu0 %v1217
  %1577 = vmatprep.subr.mxu0 0.0
  %1578 = vmatpush1.msra.mxu0 %v1218
  %1579 = vmatprep.mubr.f32.mxu0 %v1044
  %1580 = vmatmul.mubr.f32.gmra.mrb[0].mxu0 %v1043
  %v1581 = vpop.f32.mrb[0].mxu0
  %v1582 = vadd.f32 %v1482, %v1581
  %v1583 = vpop.f32.mrb[0].mxu0
  %1584 = vmatprep.mubr.f32.mxu0 %v1056
  %1585 = vmatmul.mubr.f32.gmra.mrb[0].mxu0 %v1055
  %v1586 = vpop.f32.mrb[0].mxu0
  %v1587 = vadd.f32 %v1487, %v1586
  %v1588 = vpop.f32.mrb[0].mxu0
  %1589 = vmatprep.mubr.f32.mxu0 %v1068
  %1590 = vmatmul.mubr.f32.gmra.mrb[0].mxu0 %v1067
  %v1591 = vpop.f32.mrb[0].mxu0
  %v1592 = vadd.f32 %v1492, %v1591
  %v1593 = vpop.f32.mrb[0].mxu0
  %1594 = vmatprep.mubr.f32.mxu0 %v1080
  %1595 = vmatmul.mubr.f32.gmra.mrb[0].mxu0 %v1079
  %v1596 = vpop.f32.mrb[0].mxu0
  %v1597 = vadd.f32 %v1497, %v1596
  %v1598 = vpop.f32.mrb[0].mxu0
  %1599 = vmatprep.mubr.f32.mxu0 %v1092
  %1600 = vmatmul.mubr.f32.gmra.mrb[0].mxu0 %v1091
  %v1601 = vpop.f32.mrb[0].mxu0
  %v1602 = vadd.f32 %v1502, %v1601
  %v1603 = vpop.f32.mrb[0].mxu0
  %1604 = vmatprep.mubr.f32.mxu0 %v1104
  %1605 = vmatmul.mubr.f32.gmra.mrb[0].mxu0 %v1103
  %v1606 = vpop.f32.mrb[0].mxu0
  %v1607 = vadd.f32 %v1507, %v1606
  %v1608 = vpop.f32.mrb[0].mxu0
  %1609 = vmatprep.mubr.f32.mxu0 %v1116
  %1610 = vmatmul.mubr.f32.gmra.mrb[0].mxu0 %v1115
  %v1611 = vpop.f32.mrb[0].mxu0
  %v1612 = vadd.f32 %v1512, %v1611
  %v1613 = vpop.f32.mrb[0].mxu0
  %1614 = vdwg.mxu0
  %1615 = vmatprep.subr.mxu0 0.0
  %1616 = vmatpush1.msra.mxu0 %v1219
  %1617 = vmatprep.subr.mxu0 0.0
  %1618 = vmatpush1.msra.mxu0 %v1220
  %1619 = vmatprep.subr.mxu0 0.0
  %1620 = vmatpush1.msra.mxu0 %v1221
  %1621 = vmatprep.subr.mxu0 0.0
  %1622 = vmatpush1.msra.mxu0 %v1222
  %1623 = vmatprep.subr.mxu0 0.0
  %1624 = vmatpush1.msra.mxu0 %v1223
  %1625 = vmatprep.subr.mxu0 0.0
  %1626 = vmatpush1.msra.mxu0 %v1224
  %1627 = vmatprep.subr.mxu0 0.0
  %1628 = vmatpush1.msra.mxu0 %v1225
  %1629 = vmatprep.subr.mxu0 0.0
  %1630 = vmatpush1.msra.mxu0 %v1226
  %1631 = vmatprep.subr.mxu0 0.0
  %1632 = vmatpush1.msra.mxu0 %v1227
  %1633 = vmatprep.subr.mxu0 0.0
  %1634 = vmatpush1.msra.mxu0 %v1228
  %1635 = vmatprep.subr.mxu0 0.0
  %1636 = vmatpush1.msra.mxu0 %v1229
  %1637 = vmatprep.subr.mxu0 0.0
  %1638 = vmatpush1.msra.mxu0 %v1230
  %1639 = vmatprep.subr.mxu0 0.0
  %1640 = vmatpush1.msra.mxu0 %v1231
  %1641 = vmatprep.subr.mxu0 0.0
  %1642 = vmatpush1.msra.mxu0 %v1232
  %1643 = vmatprep.subr.mxu0 0.0
  %1644 = vmatpush1.msra.mxu0 %v1233
  %1645 = vmatprep.subr.mxu0 0.0
  %1646 = vmatpush1.msra.mxu0 %v1234
  %1647 = vmatprep.subr.mxu0 0.0
  %1648 = vmatpush1.msra.mxu0 %v1235
  %1649 = vmatprep.subr.mxu0 0.0
  %1650 = vmatpush1.msra.mxu0 %v1236
  %1651 = vmatprep.subr.mxu0 0.0
  %1652 = vmatpush1.msra.mxu0 %v1237
  %1653 = vmatprep.subr.mxu0 0.0
  %1654 = vmatpush1.msra.mxu0 %v1238
  %1655 = vmatprep.subr.mxu0 0.0
  %1656 = vmatpush1.msra.mxu0 %v1239
  %1657 = vmatprep.subr.mxu0 0.0
  %1658 = vmatpush1.msra.mxu0 %v1240
  %1659 = vmatprep.subr.mxu0 0.0
  %1660 = vmatpush1.msra.mxu0 %v1241
  %1661 = vmatprep.subr.mxu0 0.0
  %1662 = vmatpush1.msra.mxu0 %v1242
  %1663 = vmatprep.subr.mxu0 0.0
  %1664 = vmatpush1.msra.mxu0 %v1243
  %1665 = vmatprep.subr.mxu0 0.0
  %1666 = vmatpush1.msra.mxu0 %v1244
  %1667 = vmatprep.subr.mxu0 0.0
  %1668 = vmatpush1.msra.mxu0 %v1245
  %1669 = vmatprep.subr.mxu0 0.0
  %1670 = vmatpush1.msra.mxu0 %v1246
  %1671 = vmatprep.subr.mxu0 0.0
  %1672 = vmatpush1.msra.mxu0 %v1247
  %1673 = vmatprep.subr.mxu0 0.0
  %1674 = vmatpush1.msra.mxu0 %v1248
  %1675 = vmatprep.subr.mxu0 0.0
  %1676 = vmatpush1.msra.mxu0 %v1249
  %1677 = vmatprep.subr.mxu0 0.0
  %1678 = vmatpush1.msra.mxu0 %v1250
  %1679 = vmatprep.mubr.f32.mxu0 %v1046
  %1680 = vmatmul.mubr.f32.gmra.mrb[0].mxu0 %v1045
  %v1681 = vpop.f32.mrb[0].mxu0
  %v1682 = vadd.f32 %v1582, %v1681
  %v1683 = vpop.f32.mrb[0].mxu0
  %1684 = vmatprep.mubr.f32.mxu0 %v1058
  %1685 = vmatmul.mubr.f32.gmra.mrb[0].mxu0 %v1057
  %v1686 = vpop.f32.mrb[0].mxu0
  %v1687 = vadd.f32 %v1587, %v1686
  %v1688 = vpop.f32.mrb[0].mxu0
  %1689 = vmatprep.mubr.f32.mxu0 %v1070
  %1690 = vmatmul.mubr.f32.gmra.mrb[0].mxu0 %v1069
  %v1691 = vpop.f32.mrb[0].mxu0
  %v1692 = vadd.f32 %v1592, %v1691
  %v1693 = vpop.f32.mrb[0].mxu0
  %1694 = vmatprep.mubr.f32.mxu0 %v1082
  %1695 = vmatmul.mubr.f32.gmra.mrb[0].mxu0 %v1081
  %v1696 = vpop.f32.mrb[0].mxu0
  %v1697 = vadd.f32 %v1597, %v1696
  %v1698 = vpop.f32.mrb[0].mxu0
  %1699 = vmatprep.mubr.f32.mxu0 %v1094
  %1700 = vmatmul.mubr.f32.gmra.mrb[0].mxu0 %v1093
  %v1701 = vpop.f32.mrb[0].mxu0
  %v1702 = vadd.f32 %v1602, %v1701
  %v1703 = vpop.f32.mrb[0].mxu0
  %1704 = vmatprep.mubr.f32.mxu0 %v1106
  %1705 = vmatmul.mubr.f32.gmra.mrb[0].mxu0 %v1105
  %v1706 = vpop.f32.mrb[0].mxu0
  %v1707 = vadd.f32 %v1607, %v1706
  %v1708 = vpop.f32.mrb[0].mxu0
  %1709 = vmatprep.mubr.f32.mxu0 %v1118
  %1710 = vmatmul.mubr.f32.gmra.mrb[0].mxu0 %v1117
  %v1711 = vpop.f32.mrb[0].mxu0
  %v1712 = vadd.f32 %v1612, %v1711
  %v1713 = vpop.f32.mrb[0].mxu0
  %1714 = vdwg.mxu0
  %1715 = vmatprep.subr.mxu0 0.0
  %1716 = vmatpush1.msra.mxu0 %v1251
  %1717 = vmatprep.subr.mxu0 0.0
  %1718 = vmatpush1.msra.mxu0 %v1252
  %1719 = vmatprep.subr.mxu0 0.0
  %1720 = vmatpush1.msra.mxu0 %v1253
  %1721 = vmatprep.subr.mxu0 0.0
  %1722 = vmatpush1.msra.mxu0 %v1254
  %1723 = vmatprep.subr.mxu0 0.0
  %1724 = vmatpush1.msra.mxu0 %v1255
  %1725 = vmatprep.subr.mxu0 0.0
  %1726 = vmatpush1.msra.mxu0 %v1256
  %1727 = vmatprep.subr.mxu0 0.0
  %1728 = vmatpush1.msra.mxu0 %v1257
  %1729 = vmatprep.subr.mxu0 0.0
  %1730 = vmatpush1.msra.mxu0 %v1258
  %1731 = vmatprep.subr.mxu0 0.0
  %1732 = vmatpush1.msra.mxu0 %v1259
  %1733 = vmatprep.subr.mxu0 0.0
  %1734 = vmatpush1.msra.mxu0 %v1260
  %1735 = vmatprep.subr.mxu0 0.0
  %1736 = vmatpush1.msra.mxu0 %v1261
  %1737 = vmatprep.subr.mxu0 0.0
  %1738 = vmatpush1.msra.mxu0 %v1262
  %1739 = vmatprep.subr.mxu0 0.0
  %1740 = vmatpush1.msra.mxu0 %v1263
  %1741 = vmatprep.subr.mxu0 0.0
  %1742 = vmatpush1.msra.mxu0 %v1264
  %1743 = vmatprep.subr.mxu0 0.0
  %1744 = vmatpush1.msra.mxu0 %v1265
  %1745 = vmatprep.subr.mxu0 0.0
  %1746 = vmatpush1.msra.mxu0 %v1266
  %1747 = vmatprep.subr.mxu0 0.0
  %1748 = vmatpush1.msra.mxu0 %v1267
  %1749 = vmatprep.subr.mxu0 0.0
  %1750 = vmatpush1.msra.mxu0 %v1268
  %1751 = vmatprep.subr.mxu0 0.0
  %1752 = vmatpush1.msra.mxu0 %v1269
  %1753 = vmatprep.subr.mxu0 0.0
  %1754 = vmatpush1.msra.mxu0 %v1270
  %1755 = vmatprep.subr.mxu0 0.0
  %1756 = vmatpush1.msra.mxu0 %v1271
  %1757 = vmatprep.subr.mxu0 0.0
  %1758 = vmatpush1.msra.mxu0 %v1272
  %1759 = vmatprep.subr.mxu0 0.0
  %1760 = vmatpush1.msra.mxu0 %v1273
  %1761 = vmatprep.subr.mxu0 0.0
  %1762 = vmatpush1.msra.mxu0 %v1274
  %1763 = vmatprep.subr.mxu0 0.0
  %1764 = vmatpush1.msra.mxu0 %v1275
  %1765 = vmatprep.subr.mxu0 0.0
  %1766 = vmatpush1.msra.mxu0 %v1276
  %1767 = vmatprep.subr.mxu0 0.0
  %1768 = vmatpush1.msra.mxu0 %v1277
  %1769 = vmatprep.subr.mxu0 0.0
  %1770 = vmatpush1.msra.mxu0 %v1278
  %1771 = vmatprep.subr.mxu0 0.0
  %1772 = vmatpush1.msra.mxu0 %v1279
  %1773 = vmatprep.subr.mxu0 0.0
  %1774 = vmatpush1.msra.mxu0 %v1280
  %1775 = vmatprep.subr.mxu0 0.0
  %1776 = vmatpush1.msra.mxu0 %v1281
  %1777 = vmatprep.subr.mxu0 0.0
  %1778 = vmatpush1.msra.mxu0 %v1282
  %1779 = vmatprep.mubr.f32.mxu0 %v1048
  %1780 = vmatmul.mubr.f32.gmra.mrb[0].mxu0 %v1047
  %v1781 = vpop.f32.mrb[0].mxu0
  %v1782 = vadd.f32 %v1682, %v1781
  %v1783 = vpop.f32.mrb[0].mxu0
  %1784 = vmatprep.mubr.f32.mxu0 %v1060
  %1785 = vmatmul.mubr.f32.gmra.mrb[0].mxu0 %v1059
  %v1786 = vpop.f32.mrb[0].mxu0
  %v1787 = vadd.f32 %v1687, %v1786
  %v1788 = vpop.f32.mrb[0].mxu0
  %1789 = vmatprep.mubr.f32.mxu0 %v1072
  %1790 = vmatmul.mubr.f32.gmra.mrb[0].mxu0 %v1071
  %v1791 = vpop.f32.mrb[0].mxu0
  %v1792 = vadd.f32 %v1692, %v1791
  %v1793 = vpop.f32.mrb[0].mxu0
  %1794 = vmatprep.mubr.f32.mxu0 %v1084
  %1795 = vmatmul.mubr.f32.gmra.mrb[0].mxu0 %v1083
  %v1796 = vpop.f32.mrb[0].mxu0
  %v1797 = vadd.f32 %v1697, %v1796
  %v1798 = vpop.f32.mrb[0].mxu0
  %1799 = vmatprep.mubr.f32.mxu0 %v1096
  %1800 = vmatmul.mubr.f32.gmra.mrb[0].mxu0 %v1095
  %v1801 = vpop.f32.mrb[0].mxu0
  %v1802 = vadd.f32 %v1702, %v1801
  %v1803 = vpop.f32.mrb[0].mxu0
  %1804 = vmatprep.mubr.f32.mxu0 %v1108
  %1805 = vmatmul.mubr.f32.gmra.mrb[0].mxu0 %v1107
  %v1806 = vpop.f32.mrb[0].mxu0
  %v1807 = vadd.f32 %v1707, %v1806
  %v1808 = vpop.f32.mrb[0].mxu0
  %1809 = vmatprep.mubr.f32.mxu0 %v1120
  %1810 = vmatmul.mubr.f32.gmra.mrb[0].mxu0 %v1119
  %v1811 = vpop.f32.mrb[0].mxu0
  %v1812 = vadd.f32 %v1712, %v1811
  %v1813 = vpop.f32.mrb[0].mxu0
  %1814 = vdwg.mxu0
  %1815 = vmatprep.subr.mxu0 0.0
  %1816 = vmatpush1.msra.mxu0 %v1283
  %1817 = vmatprep.subr.mxu0 0.0
  %1818 = vmatpush1.msra.mxu0 %v1284
  %1819 = vmatprep.subr.mxu0 0.0
  %1820 = vmatpush1.msra.mxu0 %v1285
  %1821 = vmatprep.subr.mxu0 0.0
  %1822 = vmatpush1.msra.mxu0 %v1286
  %1823 = vmatprep.subr.mxu0 0.0
  %1824 = vmatpush1.msra.mxu0 %v1287
  %1825 = vmatprep.subr.mxu0 0.0
  %1826 = vmatpush1.msra.mxu0 %v1288
  %1827 = vmatprep.subr.mxu0 0.0
  %1828 = vmatpush1.msra.mxu0 %v1289
  %1829 = vmatprep.subr.mxu0 0.0
  %1830 = vmatpush1.msra.mxu0 %v1290
  %1831 = vmatprep.subr.mxu0 0.0
  %1832 = vmatpush1.msra.mxu0 %v1291
  %1833 = vmatprep.subr.mxu0 0.0
  %1834 = vmatpush1.msra.mxu0 %v1292
  %1835 = vmatprep.subr.mxu0 0.0
  %1836 = vmatpush1.msra.mxu0 %v1293
  %1837 = vmatprep.subr.mxu0 0.0
  %1838 = vmatpush1.msra.mxu0 %v1294
  %1839 = vmatprep.subr.mxu0 0.0
  %1840 = vmatpush1.msra.mxu0 %v1295
  %1841 = vmatprep.subr.mxu0 0.0
  %1842 = vmatpush1.msra.mxu0 %v1296
  %1843 = vmatprep.subr.mxu0 0.0
  %1844 = vmatpush1.msra.mxu0 %v1297
  %1845 = vmatprep.subr.mxu0 0.0
  %1846 = vmatpush1.msra.mxu0 %v1298
  %1847 = vmatprep.subr.mxu0 0.0
  %1848 = vmatpush1.msra.mxu0 %v1299
  %1849 = vmatprep.subr.mxu0 0.0
  %1850 = vmatpush1.msra.mxu0 %v1300
  %1851 = vmatprep.subr.mxu0 0.0
  %1852 = vmatpush1.msra.mxu0 %v1301
  %1853 = vmatprep.subr.mxu0 0.0
  %1854 = vmatpush1.msra.mxu0 %v1302
  %1855 = vmatprep.subr.mxu0 0.0
  %1856 = vmatpush1.msra.mxu0 %v1303
  %1857 = vmatprep.subr.mxu0 0.0
  %1858 = vmatpush1.msra.mxu0 %v1304
  %1859 = vmatprep.subr.mxu0 0.0
  %1860 = vmatpush1.msra.mxu0 %v1305
  %1861 = vmatprep.subr.mxu0 0.0
  %1862 = vmatpush1.msra.mxu0 %v1306
  %1863 = vmatprep.subr.mxu0 0.0
  %1864 = vmatpush1.msra.mxu0 %v1307
  %1865 = vmatprep.subr.mxu0 0.0
  %1866 = vmatpush1.msra.mxu0 %v1308
  %1867 = vmatprep.subr.mxu0 0.0
  %1868 = vmatpush1.msra.mxu0 %v1309
  %1869 = vmatprep.subr.mxu0 0.0
  %1870 = vmatpush1.msra.mxu0 %v1310
  %1871 = vmatprep.subr.mxu0 0.0
  %1872 = vmatpush1.msra.mxu0 %v1311
  %1873 = vmatprep.subr.mxu0 0.0
  %1874 = vmatpush1.msra.mxu0 %v1312
  %1875 = vmatprep.subr.mxu0 0.0
  %1876 = vmatpush1.msra.mxu0 %v1313
  %1877 = vmatprep.subr.mxu0 0.0
  %1878 = vmatpush1.msra.mxu0 %v1314
  %1879 = vmatprep.mubr.f32.mxu0 %v1050
  %1880 = vmatmul.mubr.f32.gmra.mrb[0].mxu0 %v1049
  %v1881 = vpop.f32.mrb[0].mxu0
  %v1882 = vadd.f32 %v1782, %v1881
  %v1883 = vpop.f32.mrb[0].mxu0
  %1884 = vmatprep.mubr.f32.mxu0 %v1062
  %1885 = vmatmul.mubr.f32.gmra.mrb[0].mxu0 %v1061
  %v1886 = vpop.f32.mrb[0].mxu0
  %v1887 = vadd.f32 %v1787, %v1886
  %v1888 = vpop.f32.mrb[0].mxu0
  %1889 = vmatprep.mubr.f32.mxu0 %v1074
  %1890 = vmatmul.mubr.f32.gmra.mrb[0].mxu0 %v1073
  %v1891 = vpop.f32.mrb[0].mxu0
  %v1892 = vadd.f32 %v1792, %v1891
  %v1893 = vpop.f32.mrb[0].mxu0
  %1894 = vmatprep.mubr.f32.mxu0 %v1086
  %1895 = vmatmul.mubr.f32.gmra.mrb[0].mxu0 %v1085
  %v1896 = vpop.f32.mrb[0].mxu0
  %v1897 = vadd.f32 %v1797, %v1896
  %v1898 = vpop.f32.mrb[0].mxu0
  %1899 = vmatprep.mubr.f32.mxu0 %v1098
  %1900 = vmatmul.mubr.f32.gmra.mrb[0].mxu0 %v1097
  %v1901 = vpop.f32.mrb[0].mxu0
  %v1902 = vadd.f32 %v1802, %v1901
  %v1903 = vpop.f32.mrb[0].mxu0
  %1904 = vmatprep.mubr.f32.mxu0 %v1110
  %1905 = vmatmul.mubr.f32.gmra.mrb[0].mxu0 %v1109
  %v1906 = vpop.f32.mrb[0].mxu0
  %v1907 = vadd.f32 %v1807, %v1906
  %v1908 = vpop.f32.mrb[0].mxu0
  %1909 = vmatprep.mubr.f32.mxu0 %v1122
  %1910 = vmatmul.mubr.f32.gmra.mrb[0].mxu0 %v1121
  %v1911 = vpop.f32.mrb[0].mxu0
  %v1912 = vadd.f32 %v1812, %v1911
  %v1913 = vpop.f32.mrb[0].mxu0
  %1914 = vdwg.mxu0
  %v1915 = vadd.f32 %v1882, %v1887
  %v1916 = vadd.f32 %v1915, %v1892
  %v1917 = vadd.f32 %v1916, %v1897
  %v1918 = vadd.f32 %v1917, %v1902
  %v1919 = vadd.f32 %v1918, %v1907
  %v1920 = vsel %vm118, %v1912, 0.0
  %v1921 = vadd.f32 %v1919, %v1920
  %v1922 = vrot.slane %v1921, 4
  %v1923 = vadd.f32 %v1921, %v1922
  %v1924 = vrot.slane %v1923, 2
  %v1925 = vadd.f32 %v1923, %v1924
  %v1926 = vrot.slane %v1925, 1
  %v1927 = vadd.f32 %v1925, %v1926
  %v1928 = vmul.f32 %v1882, %v1882
  %v1929 = vmul.f32 %v1887, %v1887
  %v1930 = vmul.f32 %v1892, %v1892
  %v1931 = vmul.f32 %v1897, %v1897
  %v1932 = vmul.f32 %v1902, %v1902
  %v1933 = vmul.f32 %v1907, %v1907
  %v1934 = vmul.f32 %v1912, %v1912
  %v1935 = vadd.f32 %v1928, %v1929
  %v1936 = vadd.f32 %v1935, %v1930
  %v1937 = vadd.f32 %v1936, %v1931
  %v1938 = vadd.f32 %v1937, %v1932
  %v1939 = vadd.f32 %v1938, %v1933
  %v1940 = vsel %vm118, %v1934, 0.0
  %v1941 = vadd.f32 %v1939, %v1940
  %v1942 = vrot.slane %v1941, 4
  %v1943 = vadd.f32 %v1941, %v1942
  %v1944 = vrot.slane %v1943, 2
  %v1945 = vadd.f32 %v1943, %v1944
  %v1946 = vrot.slane %v1945, 1
  %v1947 = vadd.f32 %v1945, %v1946
  %v1948 = vmul.f32 %v1927, 0.020408163
  %v1949 = vmul.f32 %v1947, 0.020408163
  %v1950 = vmul.f32 %v1948, %v1948
  %v1951 = vsub.f32 %v1949, %v1950
  %v1952 = vadd.f32 %v1951, 1e-05
  %v1953 = vrsqrt.pop %v1952
  %v1954 = vld [vmem:[%s4] sm:$0x1]
  %v1955 = vmul.f32 %v1953, %v1954
  %v1956 = vld [vmem:[%s5] sm:$0x1]
  %v1957 = vmul.f32 %v1948, %v1955
  %v1958 = vsub.f32 %v1956, %v1957
  %v1959 = vlaneseq
  %v1960 = vshrl.u32 %v1959, 7
  %v1961 = vsub.s32 0, %v1960
  %v1962 = vrot.slane %v1955, %v1961
  %v1963 = vmul.f32 %v1882, %v1962
  %v1964 = vmul.f32 %v1887, %v1962
  %v1965 = vmul.f32 %v1892, %v1962
  %v1966 = vmul.f32 %v1897, %v1962
  %v1967 = vmul.f32 %v1902, %v1962
  %v1968 = vmul.f32 %v1907, %v1962
  %v1969 = vmul.f32 %v1912, %v1962
  %v1971 = vlaneseq
  %v1972 = vshrl.u32 %v1971, 7
  %v1973 = vsub.s32 0, %v1972
  %v1974 = vrot.slane %v1958, %v1973
  %v1976 = vadd.f32 %v1963, %v1974
  %v1977 = vadd.f32 %v1964, %v1974
  %v1978 = vadd.f32 %v1965, %v1974
  %v1979 = vadd.f32 %v1966, %v1974
  %v1980 = vadd.f32 %v1967, %v1974
  %v1981 = vadd.f32 %v1968, %v1974
  %v1982 = vadd.f32 %v1969, %v1974
  %v1983 = vmax.f32 %v1976, 0.0
  %v1984 = vmax.f32 %v1977, 0.0
  %v1985 = vmax.f32 %v1978, 0.0
  %v1986 = vmax.f32 %v1979, 0.0
  %v1987 = vmax.f32 %v1980, 0.0
  %v1988 = vmax.f32 %v1981, 0.0
  %v1989 = vmax.f32 %v1982, 0.0
  %v1990 = vld [vmem:[%s6] sm:$0xff]
  %v1991 = vld [vmem:[%s6 + $0x8] sm:$0xff]
  %v1992 = vld [vmem:[%s6 + $0x10] sm:$0xff]
  %v1993 = vld [vmem:[%s6 + $0x18] sm:$0xff]
  %v1994 = vld [vmem:[%s6 + $0x20] sm:$0xff]
  %v1995 = vld [vmem:[%s6 + $0x28] sm:$0xff]
  %v1996 = vld [vmem:[%s6 + $0x30] sm:$0xff]
  %v1997 = vld [vmem:[%s6 + $0x38] sm:$0xff]
  %v1998 = vld [vmem:[%s6 + $0x40] sm:$0xff]
  %v1999 = vld [vmem:[%s6 + $0x48] sm:$0xff]
  %v2000 = vld [vmem:[%s6 + $0x50] sm:$0xff]
  %v2001 = vld [vmem:[%s6 + $0x58] sm:$0xff]
  %v2002 = vld [vmem:[%s6 + $0x60] sm:$0xff]
  %v2003 = vld [vmem:[%s6 + $0x68] sm:$0xff]
  %v2004 = vld [vmem:[%s6 + $0x70] sm:$0xff]
  %v2005 = vld [vmem:[%s6 + $0x78] sm:$0xff]
  %v2006 = vld [vmem:[%s6 + $0x80] sm:$0xff]
  %v2007 = vld [vmem:[%s6 + $0x88] sm:$0xff]
  %v2008 = vld [vmem:[%s6 + $0x90] sm:$0xff]
  %v2009 = vld [vmem:[%s6 + $0x98] sm:$0xff]
  %v2010 = vld [vmem:[%s6 + $0xa0] sm:$0xff]
  %v2011 = vld [vmem:[%s6 + $0xa8] sm:$0xff]
  %v2012 = vld [vmem:[%s6 + $0xb0] sm:$0xff]
  %v2013 = vld [vmem:[%s6 + $0xb8] sm:$0xff]
  %v2014 = vld [vmem:[%s6 + $0xc0] sm:$0xff]
  %v2015 = vld [vmem:[%s6 + $0xc8] sm:$0xff]
  %v2016 = vld [vmem:[%s6 + $0xd0] sm:$0xff]
  %v2017 = vld [vmem:[%s6 + $0xd8] sm:$0xff]
  %v2018 = vld [vmem:[%s6 + $0xe0] sm:$0xff]
  %v2019 = vld [vmem:[%s6 + $0xe8] sm:$0xff]
  %v2020 = vld [vmem:[%s6 + $0xf0] sm:$0xff]
  %v2021 = vld [vmem:[%s6 + $0xf8] sm:$0xff]
  %v2022 = vld [vmem:[%s6 + $0x100] sm:$0xff]
  %v2023 = vld [vmem:[%s6 + $0x108] sm:$0xff]
  %v2024 = vld [vmem:[%s6 + $0x110] sm:$0xff]
  %v2025 = vld [vmem:[%s6 + $0x118] sm:$0xff]
  %v2026 = vld [vmem:[%s6 + $0x120] sm:$0xff]
  %v2027 = vld [vmem:[%s6 + $0x128] sm:$0xff]
  %v2028 = vld [vmem:[%s6 + $0x130] sm:$0xff]
  %v2029 = vld [vmem:[%s6 + $0x138] sm:$0xff]
  %v2030 = vld [vmem:[%s6 + $0x140] sm:$0xff]
  %v2031 = vld [vmem:[%s6 + $0x148] sm:$0xff]
  %v2032 = vld [vmem:[%s6 + $0x150] sm:$0xff]
  %v2033 = vld [vmem:[%s6 + $0x158] sm:$0xff]
  %v2034 = vld [vmem:[%s6 + $0x160] sm:$0xff]
  %v2035 = vld [vmem:[%s6 + $0x168] sm:$0xff]
  %v2036 = vld [vmem:[%s6 + $0x170] sm:$0xff]
  %v2037 = vld [vmem:[%s6 + $0x178] sm:$0xff]
  %2038 = vmatprep.subr.mxu0 %v1991
  %2039 = vmatpush1.msra.mxu0 %v1990
  %2040 = vmatprep.subr.mxu0 %v1994
  %2041 = vmatpush1.msra.mxu0 %v1993
  %2042 = vmatprep.subr.mxu0 %v1997
  %2043 = vmatpush1.msra.mxu0 %v1996
  %2044 = vmatprep.subr.mxu0 %v2000
  %2045 = vmatpush1.msra.mxu0 %v1999
  %2046 = vmatprep.subr.mxu0 %v2003
  %2047 = vmatpush1.msra.mxu0 %v2002
  %2048 = vmatprep.subr.mxu0 %v2006
  %2049 = vmatpush1.msra.mxu0 %v2005
  %2050 = vmatprep.subr.mxu0 %v2009
  %2051 = vmatpush1.msra.mxu0 %v2008
  %2052 = vmatprep.subr.mxu0 %v2012
  %2053 = vmatpush1.msra.mxu0 %v2011
  %2054 = vmatprep.subr.mxu0 %v2015
  %2055 = vmatpush1.msra.mxu0 %v2014
  %2056 = vmatprep.subr.mxu0 %v2018
  %2057 = vmatpush1.msra.mxu0 %v2017
  %2058 = vmatprep.subr.mxu0 %v2021
  %2059 = vmatpush1.msra.mxu0 %v2020
  %2060 = vmatprep.subr.mxu0 %v2024
  %2061 = vmatpush1.msra.mxu0 %v2023
  %2062 = vmatprep.subr.mxu0 %v2027
  %2063 = vmatpush1.msra.mxu0 %v2026
  %2064 = vmatprep.subr.mxu0 %v2030
  %2065 = vmatpush1.msra.mxu0 %v2029
  %2066 = vmatprep.subr.mxu0 %v2033
  %2067 = vmatpush1.msra.mxu0 %v2032
  %2068 = vmatprep.subr.mxu0 %v2036
  %2069 = vmatpush1.msra.mxu0 %v2035
  %2070 = vmatprep.subr.mxu0 0.0
  %2071 = vmatpush1.msra.mxu0 0.0
  %2072 = vmatprep.subr.mxu0 0.0
  %2073 = vmatpush1.msra.mxu0 0.0
  %2074 = vmatprep.subr.mxu0 0.0
  %2075 = vmatpush1.msra.mxu0 0.0
  %2076 = vmatprep.subr.mxu0 0.0
  %2077 = vmatpush1.msra.mxu0 0.0
  %2078 = vmatprep.subr.mxu0 0.0
  %2079 = vmatpush1.msra.mxu0 0.0
  %2080 = vmatprep.subr.mxu0 0.0
  %2081 = vmatpush1.msra.mxu0 0.0
  %2082 = vmatprep.subr.mxu0 0.0
  %2083 = vmatpush1.msra.mxu0 0.0
  %2084 = vmatprep.subr.mxu0 0.0
  %2085 = vmatpush1.msra.mxu0 0.0
  %2086 = vmatprep.subr.mxu0 0.0
  %2087 = vmatpush1.msra.mxu0 0.0
  %2088 = vmatprep.subr.mxu0 0.0
  %2089 = vmatpush1.msra.mxu0 0.0
  %2090 = vmatprep.subr.mxu0 0.0
  %2091 = vmatpush1.msra.mxu0 0.0
  %2092 = vmatprep.subr.mxu0 0.0
  %2093 = vmatpush1.msra.mxu0 0.0
  %2094 = vmatprep.subr.mxu0 0.0
  %2095 = vmatpush1.msra.mxu0 0.0
  %2096 = vmatprep.subr.mxu0 0.0
  %2097 = vmatpush1.msra.mxu0 0.0
  %2098 = vmatprep.subr.mxu0 0.0
  %2099 = vmatpush1.msra.mxu0 0.0
  %2100 = vmatprep.subr.mxu0 0.0
  %2101 = vmatpush1.msra.mxu0 0.0
  %2102 = vmatprep.mubr.f32.mxu0 0.0
  %2103 = vmatmul.mubr.f32.gmra.mrb[0].mxu0 %v1983
  %v2104 = vpop.f32.mrb[0].mxu0
  %v2105 = vadd.f32 0.0, %v2104
  %v2106 = vpop.f32.mrb[0].mxu0
  %v2107 = vadd.f32 0.0, %v2106
  %2108 = vmatprep.mubr.f32.mxu0 0.0
  %2109 = vmatmul.mubr.f32.gmra.mrb[0].mxu0 %v1984
  %v2110 = vpop.f32.mrb[0].mxu0
  %v2111 = vadd.f32 0.0, %v2110
  %v2112 = vpop.f32.mrb[0].mxu0
  %v2113 = vadd.f32 0.0, %v2112
  %2114 = vmatprep.mubr.f32.mxu0 0.0
  %2115 = vmatmul.mubr.f32.gmra.mrb[0].mxu0 %v1985
  %v2116 = vpop.f32.mrb[0].mxu0
  %v2117 = vadd.f32 0.0, %v2116
  %v2118 = vpop.f32.mrb[0].mxu0
  %v2119 = vadd.f32 0.0, %v2118
  %2120 = vmatprep.mubr.f32.mxu0 0.0
  %2121 = vmatmul.mubr.f32.gmra.mrb[0].mxu0 %v1986
  %v2122 = vpop.f32.mrb[0].mxu0
  %v2123 = vadd.f32 0.0, %v2122
  %v2124 = vpop.f32.mrb[0].mxu0
  %v2125 = vadd.f32 0.0, %v2124
  %2126 = vmatprep.mubr.f32.mxu0 0.0
  %2127 = vmatmul.mubr.f32.gmra.mrb[0].mxu0 %v1987
  %v2128 = vpop.f32.mrb[0].mxu0
  %v2129 = vadd.f32 0.0, %v2128
  %v2130 = vpop.f32.mrb[0].mxu0
  %v2131 = vadd.f32 0.0, %v2130
  %2132 = vmatprep.mubr.f32.mxu0 0.0
  %2133 = vmatmul.mubr.f32.gmra.mrb[0].mxu0 %v1988
  %v2134 = vpop.f32.mrb[0].mxu0
  %v2135 = vadd.f32 0.0, %v2134
  %v2136 = vpop.f32.mrb[0].mxu0
  %v2137 = vadd.f32 0.0, %v2136
  %2138 = vmatprep.mubr.f32.mxu0 0.0
  %2139 = vmatmul.mubr.f32.gmra.mrb[0].mxu0 %v1989
  %v2140 = vpop.f32.mrb[0].mxu0
  %v2141 = vpop.f32.mrb[0].mxu0
  %v2142 = vadd.f32 0.0, %v2141
  %2143 = vdwg.mxu0
  %2144 = vmatprep.subr.mxu0 0.0
  %2145 = vmatpush1.msra.mxu0 %v1992
  %2146 = vmatprep.subr.mxu0 0.0
  %2147 = vmatpush1.msra.mxu0 %v1995
  %2148 = vmatprep.subr.mxu0 0.0
  %2149 = vmatpush1.msra.mxu0 %v1998
  %2150 = vmatprep.subr.mxu0 0.0
  %2151 = vmatpush1.msra.mxu0 %v2001
  %2152 = vmatprep.subr.mxu0 0.0
  %2153 = vmatpush1.msra.mxu0 %v2004
  %2154 = vmatprep.subr.mxu0 0.0
  %2155 = vmatpush1.msra.mxu0 %v2007
  %2156 = vmatprep.subr.mxu0 0.0
  %2157 = vmatpush1.msra.mxu0 %v2010
  %2158 = vmatprep.subr.mxu0 0.0
  %2159 = vmatpush1.msra.mxu0 %v2013
  %2160 = vmatprep.subr.mxu0 0.0
  %2161 = vmatpush1.msra.mxu0 %v2016
  %2162 = vmatprep.subr.mxu0 0.0
  %2163 = vmatpush1.msra.mxu0 %v2019
  %2164 = vmatprep.subr.mxu0 0.0
  %2165 = vmatpush1.msra.mxu0 %v2022
  %2166 = vmatprep.subr.mxu0 0.0
  %2167 = vmatpush1.msra.mxu0 %v2025
  %2168 = vmatprep.subr.mxu0 0.0
  %2169 = vmatpush1.msra.mxu0 %v2028
  %2170 = vmatprep.subr.mxu0 0.0
  %2171 = vmatpush1.msra.mxu0 %v2031
  %2172 = vmatprep.subr.mxu0 0.0
  %2173 = vmatpush1.msra.mxu0 %v2034
  %2174 = vmatprep.subr.mxu0 0.0
  %2175 = vmatpush1.msra.mxu0 %v2037
  %2176 = vmatprep.subr.mxu0 0.0
  %2177 = vmatpush1.msra.mxu0 0.0
  %2178 = vmatprep.subr.mxu0 0.0
  %2179 = vmatpush1.msra.mxu0 0.0
  %2180 = vmatprep.subr.mxu0 0.0
  %2181 = vmatpush1.msra.mxu0 0.0
  %2182 = vmatprep.subr.mxu0 0.0
  %2183 = vmatpush1.msra.mxu0 0.0
  %2184 = vmatprep.subr.mxu0 0.0
  %2185 = vmatpush1.msra.mxu0 0.0
  %2186 = vmatprep.subr.mxu0 0.0
  %2187 = vmatpush1.msra.mxu0 0.0
  %2188 = vmatprep.subr.mxu0 0.0
  %2189 = vmatpush1.msra.mxu0 0.0
  %2190 = vmatprep.subr.mxu0 0.0
  %2191 = vmatpush1.msra.mxu0 0.0
  %2192 = vmatprep.subr.mxu0 0.0
  %2193 = vmatpush1.msra.mxu0 0.0
  %2194 = vmatprep.subr.mxu0 0.0
  %2195 = vmatpush1.msra.mxu0 0.0
  %2196 = vmatprep.subr.mxu0 0.0
  %2197 = vmatpush1.msra.mxu0 0.0
  %2198 = vmatprep.subr.mxu0 0.0
  %2199 = vmatpush1.msra.mxu0 0.0
  %2200 = vmatprep.subr.mxu0 0.0
  %2201 = vmatpush1.msra.mxu0 0.0
  %2202 = vmatprep.subr.mxu0 0.0
  %2203 = vmatpush1.msra.mxu0 0.0
  %2204 = vmatprep.subr.mxu0 0.0
  %2205 = vmatpush1.msra.mxu0 0.0
  %2206 = vmatprep.subr.mxu0 0.0
  %2207 = vmatpush1.msra.mxu0 0.0
  %2208 = vmatprep.mubr.f32.mxu0 0.0
  %2209 = vmatmul.mubr.f32.gmra.mrb[0].mxu0 %v1983
  %v2210 = vpop.f32.mrb[0].mxu0
  %v2211 = vpop.f32.mrb[0].mxu0
  %2212 = vmatprep.mubr.f32.mxu0 0.0
  %2213 = vmatmul.mubr.f32.gmra.mrb[0].mxu0 %v1984
  %v2214 = vpop.f32.mrb[0].mxu0
  %v2215 = vadd.f32 0.0, %v2214
  %v2216 = vpop.f32.mrb[0].mxu0
  %2217 = vmatprep.mubr.f32.mxu0 0.0
  %2218 = vmatmul.mubr.f32.gmra.mrb[0].mxu0 %v1985
  %v2219 = vpop.f32.mrb[0].mxu0
  %v2220 = vadd.f32 0.0, %v2219
  %v2221 = vpop.f32.mrb[0].mxu0
  %2222 = vmatprep.mubr.f32.mxu0 0.0
  %2223 = vmatmul.mubr.f32.gmra.mrb[0].mxu0 %v1986
  %v2224 = vpop.f32.mrb[0].mxu0
  %v2225 = vadd.f32 0.0, %v2224
  %v2226 = vpop.f32.mrb[0].mxu0
  %2227 = vmatprep.mubr.f32.mxu0 0.0
  %2228 = vmatmul.mubr.f32.gmra.mrb[0].mxu0 %v1987
  %v2229 = vpop.f32.mrb[0].mxu0
  %v2230 = vadd.f32 0.0, %v2229
  %v2231 = vpop.f32.mrb[0].mxu0
  %2232 = vmatprep.mubr.f32.mxu0 0.0
  %2233 = vmatmul.mubr.f32.gmra.mrb[0].mxu0 %v1988
  %v2234 = vpop.f32.mrb[0].mxu0
  %v2235 = vadd.f32 0.0, %v2234
  %v2236 = vpop.f32.mrb[0].mxu0
  %2237 = vmatprep.mubr.f32.mxu0 0.0
  %2238 = vmatmul.mubr.f32.gmra.mrb[0].mxu0 %v1989
  %v2239 = vpop.f32.mrb[0].mxu0
  %v2240 = vadd.f32 0.0, %v2239
  %v2241 = vpop.f32.mrb[0].mxu0
  %2242 = vdwg.mxu0
  %v2243 = vld [vmem:[%s7] sm:$0xff]
  %v2244 = vld [vmem:[%s7 + $0x8] sm:$0xff]
  %v2245 = vld [vmem:[%s7 + $0x10] sm:$0xff]
  %v2246 = vld [vmem:[%s7 + $0x18] sm:$0xff]
  %v2247 = vld [vmem:[%s7 + $0x20] sm:$0xff]
  %v2248 = vld [vmem:[%s7 + $0x28] sm:$0xff]
  %v2249 = vld [vmem:[%s7 + $0x30] sm:$0x1]
  %s2250 = scalar_lea.vmem %s7, 56
  %v2251 = vld [vmem:[%s2250] sm:$0xff]
  %v2252 = vld [vmem:[%s2250 + $0x8] sm:$0xff]
  %v2253 = vld [vmem:[%s2250 + $0x10] sm:$0xff]
  %v2254 = vld [vmem:[%s2250 + $0x18] sm:$0xff]
  %v2255 = vld [vmem:[%s2250 + $0x20] sm:$0xff]
  %v2256 = vld [vmem:[%s2250 + $0x28] sm:$0xff]
  %v2257 = vld [vmem:[%s2250 + $0x30] sm:$0x1]
  %2259 = vset.pattern.permute.xlu0 0
  %2260 = vperm.xlu0 %2259, %v2243
  %v2261 = vpop.permute.xlu0 %2260
  %2264 = vset.pattern.permute.xlu0 0
  %2265 = vperm.xlu0 %2264, %v2244
  %v2266 = vpop.permute.xlu0 %2265
  %2269 = vset.pattern.permute.xlu0 0
  %2270 = vperm.xlu0 %2269, %v2245
  %v2271 = vpop.permute.xlu0 %2270
  %2274 = vset.pattern.permute.xlu0 0
  %2275 = vperm.xlu0 %2274, %v2246
  %v2276 = vpop.permute.xlu0 %2275
  %2279 = vset.pattern.permute.xlu0 0
  %2280 = vperm.xlu0 %2279, %v2247
  %v2281 = vpop.permute.xlu0 %2280
  %2284 = vset.pattern.permute.xlu0 0
  %2285 = vperm.xlu0 %2284, %v2248
  %v2286 = vpop.permute.xlu0 %2285
  %2289 = vset.pattern.permute.xlu0 0
  %2290 = vperm.xlu0 %2289, %v2249
  %v2291 = vpop.permute.xlu0 %2290
  %v2293 = vmul.f32 %v2261, 0.0
  %v2294 = vmul.f32 %v2105, %v2266
  %v2295 = vmul.f32 %v2111, %v2271
  %v2296 = vmul.f32 %v2117, %v2276
  %v2297 = vmul.f32 %v2123, %v2281
  %v2298 = vmul.f32 %v2129, %v2286
  %v2299 = vmul.f32 %v2135, %v2291
  %v2300 = vadd.f32 %v2293, 0.0
  %v2301 = vadd.f32 %v2294, 0.0
  %v2302 = vadd.f32 %v2295, 0.0
  %v2303 = vadd.f32 %v2296, 0.0
  %v2304 = vadd.f32 %v2297, 0.0
  %v2305 = vadd.f32 %v2298, 0.0
  %v2306 = vadd.f32 %v2299, 0.0
  %vm2313 = vcmask 1046528
  %v2314 = vrot.slane %v2105, 1
  %v2315 = vrot.slane %v2111, 1
  %v2316 = vsel %vm2313, %v2314, %v2315
  %v2317 = vrot.slane %v2117, 1
  %v2318 = vsel %vm2313, %v2315, %v2317
  %v2319 = vrot.slane %v2123, 1
  %v2320 = vsel %vm2313, %v2317, %v2319
  %v2321 = vrot.slane %v2129, 1
  %v2322 = vsel %vm2313, %v2319, %v2321
  %v2323 = vrot.slane %v2135, 1
  %v2324 = vsel %vm2313, %v2321, %v2323
  %2325 = vrot.lane.b32.xlu0 %v2314, 96
  %v2326 = vpop.permute.xlu0 %2325
  %2327 = vrot.lane.b32.xlu0 %v2316, 96
  %v2328 = vpop.permute.xlu0 %2327
  %2329 = vrot.lane.b32.xlu0 %v2318, 96
  %v2330 = vpop.permute.xlu0 %2329
  %2331 = vrot.lane.b32.xlu0 %v2320, 96
  %v2332 = vpop.permute.xlu0 %2331
  %2333 = vrot.lane.b32.xlu0 %v2322, 96
  %v2334 = vpop.permute.xlu0 %2333
  %2335 = vrot.lane.b32.xlu0 %v2324, 96
  %v2336 = vpop.permute.xlu0 %2335
  %2337 = vrot.lane.b32.xlu0 %v2323, 96
  %v2338 = vpop.permute.xlu0 %2337
  %v2346 = vsel %vm2313, 0.0, %v2326
  %v2347 = vadd.f32 %v2300, %v2346
  %v2348 = vadd.f32 %v2301, %v2328
  %v2349 = vadd.f32 %v2302, %v2330
  %v2350 = vadd.f32 %v2303, %v2332
  %v2351 = vadd.f32 %v2304, %v2334
  %v2352 = vadd.f32 %v2305, %v2336
  %v2353 = vadd.f32 %v2306, %v2338
  %vm2354 = vcmask 1045504
  %v2355 = vrot.slane %v2105, 2
  %v2356 = vrot.slane %v2111, 2
  %v2357 = vsel %vm2354, %v2355, %v2356
  %v2358 = vrot.slane %v2117, 2
  %v2359 = vsel %vm2354, %v2356, %v2358
  %v2360 = vrot.slane %v2123, 2
  %v2361 = vsel %vm2354, %v2358, %v2360
  %v2362 = vrot.slane %v2129, 2
  %v2363 = vsel %vm2354, %v2360, %v2362
  %v2364 = vrot.slane %v2135, 2
  %v2365 = vsel %vm2354, %v2362, %v2364
  %2366 = vrot.lane.b32.xlu0 %v2355, 64
  %v2367 = vpop.permute.xlu0 %2366
  %2368 = vrot.lane.b32.xlu0 %v2357, 64
  %v2369 = vpop.permute.xlu0 %2368
  %2370 = vrot.lane.b32.xlu0 %v2359, 64
  %v2371 = vpop.permute.xlu0 %2370
  %2372 = vrot.lane.b32.xlu0 %v2361, 64
  %v2373 = vpop.permute.xlu0 %2372
  %2374 = vrot.lane.b32.xlu0 %v2363, 64
  %v2375 = vpop.permute.xlu0 %2374
  %2376 = vrot.lane.b32.xlu0 %v2365, 64
  %v2377 = vpop.permute.xlu0 %2376
  %2378 = vrot.lane.b32.xlu0 %v2364, 64
  %v2379 = vpop.permute.xlu0 %2378
  %v2387 = vsel %vm2354, 0.0, %v2367
  %2389 = vset.pattern.permute.xlu0 0
  %2390 = vperm.xlu0 %2389, %v2251
  %v2391 = vpop.permute.xlu0 %2390
  %2394 = vset.pattern.permute.xlu0 0
  %2395 = vperm.xlu0 %2394, %v2252
  %v2396 = vpop.permute.xlu0 %2395
  %2399 = vset.pattern.permute.xlu0 0
  %2400 = vperm.xlu0 %2399, %v2253
  %v2401 = vpop.permute.xlu0 %2400
  %2404 = vset.pattern.permute.xlu0 0
  %2405 = vperm.xlu0 %2404, %v2254
  %v2406 = vpop.permute.xlu0 %2405
  %2409 = vset.pattern.permute.xlu0 0
  %2410 = vperm.xlu0 %2409, %v2255
  %v2411 = vpop.permute.xlu0 %2410
  %2414 = vset.pattern.permute.xlu0 0
  %2415 = vperm.xlu0 %2414, %v2256
  %v2416 = vpop.permute.xlu0 %2415
  %2419 = vset.pattern.permute.xlu0 0
  %2420 = vperm.xlu0 %2419, %v2257
  %v2421 = vpop.permute.xlu0 %2420
  %v2423 = vmul.f32 %v2387, %v2391
  %v2424 = vmul.f32 %v2369, %v2396
  %v2425 = vmul.f32 %v2371, %v2401
  %v2426 = vmul.f32 %v2373, %v2406
  %v2427 = vmul.f32 %v2375, %v2411
  %v2428 = vmul.f32 %v2377, %v2416
  %v2429 = vmul.f32 %v2379, %v2421
  %v2430 = vadd.f32 %v2347, %v2423
  %v2431 = vadd.f32 %v2348, %v2424
  %v2432 = vadd.f32 %v2349, %v2425
  %v2433 = vadd.f32 %v2350, %v2426
  %v2434 = vadd.f32 %v2351, %v2427
  %v2435 = vadd.f32 %v2352, %v2428
  %v2436 = vadd.f32 %v2353, %v2429
  %v2437 = vrot.slane %v2105, 7
  %v2438 = vrot.slane %v2111, 7
  %v2439 = vsel %vm118, %v2437, %v2438
  %v2440 = vrot.slane %v2117, 7
  %v2441 = vsel %vm118, %v2438, %v2440
  %v2442 = vrot.slane %v2123, 7
  %v2443 = vsel %vm118, %v2440, %v2442
  %v2444 = vrot.slane %v2129, 7
  %v2445 = vsel %vm118, %v2442, %v2444
  %v2446 = vrot.slane %v2135, 7
  %v2447 = vsel %vm118, %v2444, %v2446
  %2448 = vrot.lane.b32.xlu0 %v2437, 32
  %v2449 = vpop.permute.xlu0 %2448
  %2450 = vrot.lane.b32.xlu0 %v2439, 32
  %v2451 = vpop.permute.xlu0 %2450
  %2452 = vrot.lane.b32.xlu0 %v2441, 32
  %v2453 = vpop.permute.xlu0 %2452
  %2454 = vrot.lane.b32.xlu0 %v2443, 32
  %v2455 = vpop.permute.xlu0 %2454
  %2456 = vrot.lane.b32.xlu0 %v2445, 32
  %v2457 = vpop.permute.xlu0 %2456
  %2458 = vrot.lane.b32.xlu0 %v2447, 32
  %v2459 = vpop.permute.xlu0 %2458
  %2460 = vrot.lane.b32.xlu0 %v2446, 32
  %v2461 = vpop.permute.xlu0 %2460
  %v2469 = vsel %vm118, 0.0, %v2449
  %v2470 = vmul.f32 %v2469, %v2261
  %v2471 = vmul.f32 %v2451, %v2266
  %v2472 = vmul.f32 %v2453, %v2271
  %v2473 = vmul.f32 %v2455, %v2276
  %v2474 = vmul.f32 %v2457, %v2281
  %v2475 = vmul.f32 %v2459, %v2286
  %v2476 = vmul.f32 %v2461, %v2291
  %v2477 = vadd.f32 %v2430, %v2470
  %v2478 = vadd.f32 %v2431, %v2471
  %v2479 = vadd.f32 %v2432, %v2472
  %v2480 = vadd.f32 %v2433, %v2473
  %v2481 = vadd.f32 %v2434, %v2474
  %v2482 = vadd.f32 %v2435, %v2475
  %v2483 = vadd.f32 %v2436, %v2476
  %v2484 = vadd.f32 %v2477, %v2107
  %v2485 = vadd.f32 %v2478, %v2113
  %v2486 = vadd.f32 %v2479, %v2119
  %v2487 = vadd.f32 %v2480, %v2125
  %v2488 = vadd.f32 %v2481, %v2131
  %v2489 = vadd.f32 %v2482, %v2137
  %v2490 = vadd.f32 %v2483, %v2142
  %v2498 = vrot.slane %v2107, 1
  %v2499 = vrot.slane %v2113, 1
  %v2500 = vsel %vm2313, %v2498, %v2499
  %v2501 = vrot.slane %v2119, 1
  %v2502 = vsel %vm2313, %v2499, %v2501
  %v2503 = vrot.slane %v2125, 1
  %v2504 = vsel %vm2313, %v2501, %v2503
  %v2505 = vrot.slane %v2131, 1
  %v2506 = vsel %vm2313, %v2503, %v2505
  %v2507 = vrot.slane %v2137, 1
  %v2508 = vsel %vm2313, %v2505, %v2507
  %v2509 = vrot.slane %v2142, 1
  %v2510 = vsel %vm2313, %v2507, %v2509
  %v2517 = vmul.f32 %v2500, %v2391
  %v2518 = vmul.f32 %v2502, %v2396
  %v2519 = vmul.f32 %v2504, %v2401
  %v2520 = vmul.f32 %v2506, %v2406
  %v2521 = vmul.f32 %v2508, %v2411
  %v2522 = vmul.f32 %v2510, %v2416
  %v2523 = vmul.f32 %v2421, 0.0
  %2531 = vrot.lane.b32.xlu0 %v2517, 96
  %v2532 = vpop.permute.xlu0 %2531
  %2533 = vrot.lane.b32.xlu0 %v2518, 96
  %v2534 = vpop.permute.xlu0 %2533
  %2535 = vrot.lane.b32.xlu0 %v2519, 96
  %v2536 = vpop.permute.xlu0 %2535
  %2537 = vrot.lane.b32.xlu0 %v2520, 96
  %v2538 = vpop.permute.xlu0 %2537
  %2539 = vrot.lane.b32.xlu0 %v2521, 96
  %v2540 = vpop.permute.xlu0 %2539
  %2541 = vrot.lane.b32.xlu0 %v2522, 96
  %v2542 = vpop.permute.xlu0 %2541
  %2543 = vrot.lane.b32.xlu0 %v2523, 96
  %v2544 = vpop.permute.xlu0 %2543
  %v2552 = vadd.f32 %v2484, %v2532
  %v2553 = vadd.f32 %v2485, %v2534
  %v2554 = vadd.f32 %v2486, %v2536
  %v2555 = vadd.f32 %v2487, %v2538
  %v2556 = vadd.f32 %v2488, %v2540
  %v2557 = vadd.f32 %v2489, %v2542
  %v2558 = vadd.f32 %v2490, %v2544
  %vm2559 = vcmask 1041408
  %v2560 = vrot.slane %v2107, 6
  %v2561 = vrot.slane %v2113, 6
  %v2562 = vsel %vm2559, %v2560, %v2561
  %v2563 = vrot.slane %v2119, 6
  %v2564 = vsel %vm2559, %v2561, %v2563
  %v2565 = vrot.slane %v2125, 6
  %v2566 = vsel %vm2559, %v2563, %v2565
  %v2567 = vrot.slane %v2131, 6
  %v2568 = vsel %vm2559, %v2565, %v2567
  %v2569 = vrot.slane %v2137, 6
  %v2570 = vsel %vm2559, %v2567, %v2569
  %v2571 = vrot.slane %v2142, 6
  %v2572 = vsel %vm2559, %v2569, %v2571
  %vm2579 = vcmask 1042432
  %v2580 = vsel %vm2579, %v2572, 0.0
  %v2581 = vmul.f32 %v2562, %v2261
  %v2582 = vmul.f32 %v2564, %v2266
  %v2583 = vmul.f32 %v2566, %v2271
  %v2584 = vmul.f32 %v2568, %v2276
  %v2585 = vmul.f32 %v2570, %v2281
  %v2586 = vmul.f32 %v2580, %v2286
  %v2587 = vmul.f32 %v2291, 0.0
  %2595 = vrot.lane.b32.xlu0 %v2581, 64
  %v2596 = vpop.permute.xlu0 %2595
  %2597 = vrot.lane.b32.xlu0 %v2582, 64
  %v2598 = vpop.permute.xlu0 %2597
  %2599 = vrot.lane.b32.xlu0 %v2583, 64
  %v2600 = vpop.permute.xlu0 %2599
  %2601 = vrot.lane.b32.xlu0 %v2584, 64
  %v2602 = vpop.permute.xlu0 %2601
  %2603 = vrot.lane.b32.xlu0 %v2585, 64
  %v2604 = vpop.permute.xlu0 %2603
  %2605 = vrot.lane.b32.xlu0 %v2586, 64
  %v2606 = vpop.permute.xlu0 %2605
  %2607 = vrot.lane.b32.xlu0 %v2587, 64
  %v2608 = vpop.permute.xlu0 %2607
  %v2616 = vadd.f32 %v2552, %v2596
  %v2617 = vadd.f32 %v2553, %v2598
  %v2618 = vadd.f32 %v2554, %v2600
  %v2619 = vadd.f32 %v2555, %v2602
  %v2620 = vadd.f32 %v2556, %v2604
  %v2621 = vadd.f32 %v2557, %v2606
  %v2622 = vadd.f32 %v2558, %v2608
  %v2623 = vrot.slane %v2107, 7
  %v2624 = vrot.slane %v2113, 7
  %v2625 = vsel %vm118, %v2623, %v2624
  %v2626 = vrot.slane %v2119, 7
  %v2627 = vsel %vm118, %v2624, %v2626
  %v2628 = vrot.slane %v2125, 7
  %v2629 = vsel %vm118, %v2626, %v2628
  %v2630 = vrot.slane %v2131, 7
  %v2631 = vsel %vm118, %v2628, %v2630
  %v2632 = vrot.slane %v2137, 7
  %v2633 = vsel %vm118, %v2630, %v2632
  %v2634 = vrot.slane %v2142, 7
  %v2635 = vsel %vm118, %v2632, %v2634
  %v2637 = vsel %vm2559, %v2635, 0.0
  %2640 = vrot.lane.b32.xlu0 %v2625, 32
  %v2641 = vpop.permute.xlu0 %2640
  %2642 = vrot.lane.b32.xlu0 %v2627, 32
  %v2643 = vpop.permute.xlu0 %2642
  %2644 = vrot.lane.b32.xlu0 %v2629, 32
  %v2645 = vpop.permute.xlu0 %2644
  %2646 = vrot.lane.b32.xlu0 %v2631, 32
  %v2647 = vpop.permute.xlu0 %2646
  %2648 = vrot.lane.b32.xlu0 %v2633, 32
  %v2649 = vpop.permute.xlu0 %2648
  %2650 = vrot.lane.b32.xlu0 %v2637, 32
  %v2651 = vpop.permute.xlu0 %2650
  %2652 = vrot.lane.b32.xlu0 0.0, 32
  %v2653 = vpop.permute.xlu0 %2652
  %v2661 = vadd.f32 %v2616, %v2641
  %v2662 = vadd.f32 %v2617, %v2643
  %v2663 = vadd.f32 %v2618, %v2645
  %v2664 = vadd.f32 %v2619, %v2647
  %v2665 = vadd.f32 %v2620, %v2649
  %v2666 = vadd.f32 %v2621, %v2651
  %v2667 = vadd.f32 %v2622, %v2653
  %v2668 = vsel %vm118, %v2240, 0.0
  %v2669 = vmul.f32 %v2215, %v2391
  %v2670 = vmul.f32 %v2220, %v2396
  %v2671 = vmul.f32 %v2225, %v2401
  %v2672 = vmul.f32 %v2230, %v2406
  %v2673 = vmul.f32 %v2235, %v2411
  %v2674 = vmul.f32 %v2668, %v2416
  %v2675 = vadd.f32 %v2661, %v2669
  %v2676 = vadd.f32 %v2662, %v2670
  %v2677 = vadd.f32 %v2663, %v2671
  %v2678 = vadd.f32 %v2664, %v2672
  %v2679 = vadd.f32 %v2665, %v2673
  %v2680 = vadd.f32 %v2666, %v2674
  %v2681 = vadd.f32 %v2667, %v2523
  %vm2682 = vcmask 261120
  %2683 = vst.msk [vmem:[%s8] sm:$0xff] %vm2682, %v2675
  %2684 = vst.msk [vmem:[%s8 + $0x8] sm:$0xff] %vm2682, %v2676
  %2685 = vst.msk [vmem:[%s8 + $0x10] sm:$0xff] %vm2682, %v2677
  %2686 = vst.msk [vmem:[%s8 + $0x18] sm:$0xff] %vm2682, %v2678
  %2687 = vst.msk [vmem:[%s8 + $0x20] sm:$0xff] %vm2682, %v2679
  %2688 = vst.msk [vmem:[%s8 + $0x28] sm:$0xff] %vm2682, %v2680
  %vm2689 = vcmask 253952
  %2690 = vst.msk [vmem:[%s8 + $0x30] sm:$0x1] %vm2689, %v2681
  // Predicated region
  $region34: #{fused_forward.1} parent=0 // pred_check
    _
  $region35: #{fused_forward.1} parent=0 // pred_check_branch
    %2692 = sbr.rel (0) target = $region37
  $region36: #{fused_forward.1} parent=0 // pred_region
    _
  $region37: #{fused_forward.1} parent=0 // pred_fallthru
    _
  // Predicated region
  $region38: #{fused_forward.1} parent=0 // pred_check
    _
  $region39: #{fused_forward.1} parent=0 // pred_check_branch
    %2694 = sbr.rel (0) target = $region41
  $region40: #{fused_forward.1} parent=0 // pred_region
    _
  $region41: #{fused_forward.1} parent=0 // pred_fallthru
    _

</llo_original>
